<compile_context>
chip_gen: v7x
topology: tpu7x:2x2x1
jax: 0.10.0
libtpu: 0.0.40
codegen_flags: <defaults>
</compile_context>

<pallas_src>
import functools

import jax
import jax.numpy as jnp
from jax.experimental import pallas as pl
from jax.experimental.pallas import tpu as pltpu

BN_EPS = 1e-5
LANES = 128          # padded feature width (lane-dense)


# ----------------------------- Pallas kernel -----------------------------

def fused_gcn_kernel(a_ref, xw0_ref, w2_ref, w3_ref, shift_ref,
                     mask_ref, maskT_ref, invcnt_ref,
                     w1a_ref, w1b_ref, b1_ref, wc2_ref, b2_ref,
                     o_ref,
                     ha_ref, hb_ref, sum_ref, max_ref,
                     *, tm, a_resident, num_graphs):
    """grid = (layer, row_tile). One fused forward pass of SimpleGCN."""
    l = pl.program_id(0)
    t = pl.program_id(1)
    n_tiles = pl.num_programs(1)

    row0 = pl.multiple_of(t * tm, tm)
    if a_resident:
        a_rows = a_ref[pl.ds(row0, tm), :]      # A lives fully in VMEM
    else:
        a_rows = a_ref[...]                     # streamed (tm, n_pad) tile

    shift = shift_ref[...]                      # (1, LANES) folded-BN shift of layer l

    def layer_rows(src_bf16, w_ref):
        # rows = ReLU( (A_tile @ h) @ W + shift )   (all MXU ops bf16 -> f32 acc)
        ah = jnp.dot(a_rows, src_bf16, preferred_element_type=jnp.float32)
        if w_ref is not None:
            ah = jnp.dot(ah.astype(jnp.bfloat16), w_ref[...],
                         preferred_element_type=jnp.float32)
        return jnp.maximum(ah + shift, 0.0)

    # ---- layer 0: W1 already folded into the precomputed XW0 input ----------
    @pl.when(l == 0)
    def _():
        rows = layer_rows(xw0_ref[...], None)
        ha_ref[pl.ds(row0, tm), :] = rows.astype(jnp.bfloat16)

    # ---- layer 1: reads ha, writes hb (no in-place hazard) ------------------
    @pl.when(l == 1)
    def _():
        rows = layer_rows(ha_ref[...], w2_ref)
        hb_ref[pl.ds(row0, tm), :] = rows.astype(jnp.bfloat16)

    # ---- layer 2: pooling + classifier; no h writeback needed ---------------
    @pl.when(l == 2)
    def _():
        rows = layer_rows(hb_ref[...], w3_ref)          # (tm, LANES) f32, >= 0

        @pl.when(t == 0)
        def _():
            sum_ref[...] = jnp.zeros_like(sum_ref)
            max_ref[...] = jnp.zeros_like(max_ref)      # ReLU output >= 0

        # mean pool numerator: bf16 MXU matmul, f32 accumulation
        sum_ref[...] += jnp.dot(mask_ref[...], rows.astype(jnp.bfloat16),
                                preferred_element_type=jnp.float32)

        # masked max pool: multiplicative 0/1 mask, per-graph (static unroll)
        m_t = maskT_ref[...].astype(jnp.float32)        # (tm, G)
        gmax = [jnp.max(rows * m_t[:, gi:gi + 1], axis=0, keepdims=True)
                for gi in range(num_graphs)]
        max_ref[...] = jnp.maximum(max_ref[...], jnp.concatenate(gmax, axis=0))

        @pl.when(t == n_tiles - 1)
        def _():
            mean = (sum_ref[...] * invcnt_ref[...]).astype(jnp.bfloat16)
            mx = max_ref[...].astype(jnp.bfloat16)
            # classifier: Linear(cat[mean, max]) -> ReLU -> (Dropout=id) -> Linear
            # (cw1 pre-split into mean/max halves: no lane-axis concatenation)
            h1 = (jnp.dot(mean, w1a_ref[...], preferred_element_type=jnp.float32)
                  + jnp.dot(mx, w1b_ref[...], preferred_element_type=jnp.float32)
                  + b1_ref[...])
            h1 = jnp.maximum(h1, 0.0).astype(jnp.bfloat16)
            o_ref[...] = (jnp.dot(h1, wc2_ref[...],
                                  preferred_element_type=jnp.float32)
                          + b2_ref[...])


# ----------------------------- plain-JAX glue -----------------------------

def _round_up(x, m):
    return (x + m - 1) // m * m


def _pad2(a, rows, cols):
    out = jnp.zeros((rows, cols), a.dtype)
    return out.at[:a.shape[0], :a.shape[1]].set(a)


def build_norm_adj(edge_index, num_nodes):
    """Dense D^-1/2 (A + I) D^-1/2 as used by PyG GCNConv (duplicate edges sum)."""
    src, dst = edge_index[0], edge_index[1]
    a = jnp.zeros((num_nodes, num_nodes), jnp.float32).at[dst, src].add(1.0)
    a = a + jnp.eye(num_nodes, dtype=jnp.float32)                 # self loops
    deg = a.sum(axis=1)
    dinv = jnp.where(deg > 0, jax.lax.rsqrt(deg), 0.0)
    return dinv[:, None] * a * dinv[None, :]


def _fold_bn(w, b, bn):
    """Fold conv bias + eval-mode BatchNorm into (W', shift)."""
    s = bn["gamma"] * jax.lax.rsqrt(bn["var"] + BN_EPS)           # [1, dout]
    return w * s, (b - bn["mean"]) * s + bn["beta"]


def _vmem_budget_bytes():
    """Generation-aware VMEM budget with compiler headroom."""
    phys = 64 * 1024 * 1024                    # conservative default (v7x-sized)
    try:
        phys = int(pltpu.get_tpu_info().vmem_capacity_bytes)
    except Exception:
        pass
    # leave ~8 MiB headroom; cap at 100 MiB on 128-MiB parts (v5e/v6e)
    return max(min(phys - 8 * 1024 * 1024, 100 * 1024 * 1024), 32 * 1024 * 1024)


def _choose_tiling(n, budget):
    """Pick (tm, n_pad, a_resident) so the dominant A stream fits the budget."""
    per_row_fixed = 4 * LANES * 2          # ha + hb scratch + double-buffered XW0 (bf16)
    misc = 4 * 1024 * 1024                 # weights, intermediates, slack
    if n <= 512:
        tm = _round_up(max(n, 16), 16)     # bf16 sublane packing is 16
        n_pad = tm
    else:
        tm = 512
        n_pad = _round_up(n, tm)
        # shrink the row tile until the streamed A double-buffer fits
        while tm > 128 and (4 * tm * n_pad + per_row_fixed * n_pad + misc) > budget:
            tm //= 2
            n_pad = _round_up(n, tm)
    # fully VMEM-resident A (conservatively counted double-buffered) if it fits
    a_resident = (4 * n_pad * n_pad + per_row_fixed * n_pad + misc) <= budget
    return tm, n_pad, a_resident


def init_params(key, input_dim=3, hidden_dim=64, output_dim=2):
    half = hidden_dim // 2
    ks = jax.random.split(key, 8)

    def lin(k, fan_in, fan_out):
        # weights stored [in, out] (pre-transposed vs torch)
        return 0.1 * jax.random.normal(k, (fan_in, fan_out), jnp.float32)

    def bn(dim):
        return dict(gamma=jnp.ones((1, dim), jnp.float32),
                    beta=jnp.zeros((1, dim), jnp.float32),
                    mean=jnp.zeros((1, dim), jnp.float32),
                    var=jnp.ones((1, dim), jnp.float32))

    return {
        "w1": lin(ks[0], input_dim, hidden_dim), "b1": jnp.zeros((1, hidden_dim), jnp.float32),
        "w2": lin(ks[1], hidden_dim, hidden_dim), "b2": jnp.zeros((1, hidden_dim), jnp.float32),
        "w3": lin(ks[2], hidden_dim, half), "b3": jnp.zeros((1, half), jnp.float32),
        "bn1": bn(hidden_dim), "bn2": bn(hidden_dim), "bn3": bn(half),
        "cw1": lin(ks[3], hidden_dim, half), "cb1": jnp.zeros((1, half), jnp.float32),
        "cw2": lin(ks[4], half, output_dim), "cb2": jnp.zeros((1, output_dim), jnp.float32),
    }


@functools.partial(jax.jit, static_argnames=("num_graphs",))
def simple_gcn_forward(p, x, edge_index, batch, num_graphs):
    n, _ = x.shape
    g = num_graphs
    out_dim = p["cw2"].shape[1]

    budget = _vmem_budget_bytes()
    tm, n_pad, a_resident = _choose_tiling(n, budget)
    n_tiles = n_pad // tm

    # --- dense normalized adjacency (bf16), folded-BN weights, padded inputs ---
    a_hat = build_norm_adj(edge_index, n)
    a_pad = _pad2(a_hat, n_pad, n_pad).astype(jnp.bfloat16)

    w1f, s1 = _fold_bn(p["w1"], p["b1"], p["bn1"])
    w2f, s2 = _fold_bn(p["w2"], p["b2"], p["bn2"])
    w3f, s3 = _fold_bn(p["w3"], p["b3"], p["bn3"])

    # layer-0 feature transform in XLA (in-kernel K=3 padded to 128 wastes MXU)
    xw0 = x.astype(jnp.float32) @ w1f                               # [N, hidden]
    xw0_pad = _pad2(xw0, n_pad, LANES).astype(jnp.bfloat16)

    w2_pad = _pad2(w2f, LANES, LANES).astype(jnp.bfloat16)
    w3_pad = _pad2(w3f, LANES, LANES).astype(jnp.bfloat16)
    shift_stack = jnp.stack([_pad2(s, 1, LANES) for s in (s1, s2, s3)])   # [3,1,128] f32
    # NOTE: padded node rows of h become ReLU(shift) != 0 in general; harmless
    # since A's padded columns and the pooling masks are zero there.

    mask = (batch[None, :] == jnp.arange(g, dtype=batch.dtype)[:, None]
            ).astype(jnp.float32)                                   # [G, N] 0/1
    counts = jnp.sum(mask, axis=1, keepdims=True)                   # [G, 1]
    inv_cnt = 1.0 / jnp.maximum(counts, 1.0)                        # precomputed divide
    mask_pad = _pad2(mask, g, n_pad).astype(jnp.bfloat16)           # [G, n_pad]
    maskT_pad = _pad2(mask.T, n_pad, g).astype(jnp.bfloat16)        # [n_pad, G]

    half = p["cw1"].shape[0] // 2                                   # mean/max split
    w1a = _pad2(p["cw1"][:half], LANES, LANES).astype(jnp.bfloat16)
    w1b = _pad2(p["cw1"][half:], LANES, LANES).astype(jnp.bfloat16)
    b1c = _pad2(p["cb1"], 1, LANES)
    wc2 = _pad2(p["cw2"], LANES, LANES).astype(jnp.bfloat16)
    b2c = _pad2(p["cb2"], 1, LANES)

    if a_resident:
        a_spec = pl.BlockSpec((n_pad, n_pad), lambda l, t: (0, 0))   # DMA'd once
    else:
        a_spec = pl.BlockSpec((tm, n_pad), lambda l, t: (t, 0))      # streamed tiles

    kernel = functools.partial(fused_gcn_kernel, tm=tm,
                               a_resident=a_resident, num_graphs=g)

    out = pl.pallas_call(
        kernel,
        out_shape=jax.ShapeDtypeStruct((g, LANES), jnp.float32),
        grid_spec=pltpu.PrefetchScalarGridSpec(
            num_scalar_prefetch=0,
            grid=(3, n_tiles),
            in_specs=[
                a_spec,                                              # A_hat
                pl.BlockSpec((n_pad, LANES), lambda l, t: (0, 0)),   # XW0 (bf16)
                pl.BlockSpec((LANES, LANES), lambda l, t: (0, 0)),   # W2 folded (bf16)
                pl.BlockSpec((LANES, LANES), lambda l, t: (0, 0)),   # W3 folded (bf16)
                pl.BlockSpec((None, 1, LANES), lambda l, t: (l, 0, 0)),  # shift_l
                pl.BlockSpec((g, tm), lambda l, t: (0, t)),          # mask tile (bf16)
                pl.BlockSpec((tm, g), lambda l, t: (t, 0)),          # mask^T tile (bf16)
                pl.BlockSpec((g, 1), lambda l, t: (0, 0)),           # 1/node-count
                pl.BlockSpec((LANES, LANES), lambda l, t: (0, 0)),   # cls W1 (mean half)
                pl.BlockSpec((LANES, LANES), lambda l, t: (0, 0)),   # cls W1 (max half)
                pl.BlockSpec((1, LANES), lambda l, t: (0, 0)),       # cls b1
                pl.BlockSpec((LANES, LANES), lambda l, t: (0, 0)),   # cls W2
                pl.BlockSpec((1, LANES), lambda l, t: (0, 0)),       # cls b2
            ],
            out_specs=pl.BlockSpec((g, LANES), lambda l, t: (0, 0)),
            scratch_shapes=[
                pltpu.VMEM((n_pad, LANES), jnp.bfloat16),   # ha (layer-0 output)
                pltpu.VMEM((n_pad, LANES), jnp.bfloat16),   # hb (layer-1 output)
                pltpu.VMEM((g, LANES), jnp.float32),        # mean-pool accumulator
                pltpu.VMEM((g, LANES), jnp.float32),        # max-pool accumulator
            ]),
        compiler_params=pltpu.CompilerParams(
            # Both axes sequential: layer l+1 reads the full VMEM-resident
            # output of layer l (scratch carry); megacore split would be wrong.
            dimension_semantics=("arbitrary", "arbitrary"),
            vmem_limit_bytes=budget),
    )(a_pad, xw0_pad, w2_pad, w3_pad, shift_stack, mask_pad, maskT_pad,
      inv_cnt, w1a, w1b, b1c, wc2, b2c)

    return out[:, :out_dim]


# ----------------------------- demo -----------------------------

if __name__ == "__main__":
    key = jax.random.PRNGKey(0)
    N_per, G = 8, 2
    N = N_per * G
    input_dim, hidden_dim, output_dim = 3, 64, 2

    key, kx = jax.random.split(key)
    x = jax.random.normal(kx, (N, input_dim), jnp.float32)

    # undirected ring within each graph
    edges = []
    for gi in range(G):
        off = gi * N_per
        for i in range(N_per):
            j = (i + 1) % N_per
            edges.append((off + i, off + j))
            edges.append((off + j, off + i))
    edge_index = jnp.array(edges, dtype=jnp.int32).T              # [2, E]
    batch = jnp.repeat(jnp.arange(G, dtype=jnp.int32), N_per)     # [N]

    params = init_params(jax.random.PRNGKey(0), input_dim, hidden_dim, output_dim)

    # TODO(synk): train-mode Dropout / batch-statistics BatchNorm not implemented
    # (eval-mode semantics: Dropout = identity, BN uses running stats).
    out = simple_gcn_forward(params, x, edge_index, batch, num_graphs=G)
    out = jax.block_until_ready(out)
    assert out.shape == (G, output_dim) and out.dtype == jnp.float32
    assert bool(jnp.all(jnp.isfinite(out)))
    print("KERNEL_OK")
</pallas_src>

<mosaic_0001>
module attributes {stable_mosaic.version = 11 : i64} {
  func.func private @main(%arg0: i32) attributes {dimension_semantics = [#tpu.dimension_semantics<core_parallel>], iteration_bounds = array<i64: 2>, tpu.core_type = #tpu.core_type<sc_scalar_subcore>, window_params = []} {
    return
  }
}

module attributes {stable_mosaic.version = 11 : i64} {
  func.func private @main(%arg0: i32) attributes {dimension_semantics = [#tpu.dimension_semantics<core_parallel>], iteration_bounds = array<i64: 2>, tpu.core_type = #tpu.core_type<sc_scalar_subcore>, window_params = []} {
    return
  }
}

module attributes {stable_mosaic.version = 11 : i64} {
  func.func @fused_gcn_kernel(%arg0: i32, %arg1: i32, %arg2: memref<16x16xbf16, #tpu.memory_space<vmem>>, %arg3: memref<16x128xbf16, #tpu.memory_space<vmem>>, %arg4: memref<128x128xbf16, #tpu.memory_space<vmem>>, %arg5: memref<128x128xbf16, #tpu.memory_space<vmem>>, %arg6: memref<1x1x128xf32, #tpu.memory_space<vmem>>, %arg7: memref<2x16xbf16, #tpu.memory_space<vmem>>, %arg8: memref<16x2xbf16, #tpu.memory_space<vmem>>, %arg9: memref<2x1xf32, #tpu.memory_space<vmem>>, %arg10: memref<128x128xbf16, #tpu.memory_space<vmem>>, %arg11: memref<128x128xbf16, #tpu.memory_space<vmem>>, %arg12: memref<1x128xf32, #tpu.memory_space<vmem>>, %arg13: memref<128x128xbf16, #tpu.memory_space<vmem>>, %arg14: memref<1x128xf32, #tpu.memory_space<vmem>>, %arg15: memref<2x128xf32, #tpu.memory_space<vmem>>, %arg16: memref<16x128xbf16, #tpu.memory_space<vmem>>, %arg17: memref<16x128xbf16, #tpu.memory_space<vmem>>, %arg18: memref<2x128xf32, #tpu.memory_space<vmem>>, %arg19: memref<2x128xf32, #tpu.memory_space<vmem>>) attributes {dimension_semantics = [#tpu.dimension_semantics<arbitrary>, #tpu.dimension_semantics<arbitrary>], iteration_bounds = array<i64: 3, 1>, scalar_prefetch = 0 : i64, scratch_operands = 4 : i64, tpu.core_type = #tpu.core_type<tc>, window_params = [{pipeline_mode = #tpu.pipeline_mode<synchronous>, transform_indices = @transform_0, window_bounds = array<i64: 16, 16>}, {pipeline_mode = #tpu.pipeline_mode<synchronous>, transform_indices = @transform_1, window_bounds = array<i64: 16, 128>}, {pipeline_mode = #tpu.pipeline_mode<synchronous>, transform_indices = @transform_2, window_bounds = array<i64: 128, 128>}, {pipeline_mode = #tpu.pipeline_mode<synchronous>, transform_indices = @transform_3, window_bounds = array<i64: 128, 128>}, {transform_indices = @transform_4, window_bounds = array<i64: 1, 1, 128>}, {transform_indices = @transform_5, window_bounds = array<i64: 2, 16>}, {transform_indices = @transform_6, window_bounds = array<i64: 16, 2>}, {pipeline_mode = #tpu.pipeline_mode<synchronous>, transform_indices = @transform_7, window_bounds = array<i64: 2, 1>}, {pipeline_mode = #tpu.pipeline_mode<synchronous>, transform_indices = @transform_8, window_bounds = array<i64: 128, 128>}, {pipeline_mode = #tpu.pipeline_mode<synchronous>, transform_indices = @transform_9, window_bounds = array<i64: 128, 128>}, {pipeline_mode = #tpu.pipeline_mode<synchronous>, transform_indices = @transform_10, window_bounds = array<i64: 1, 128>}, {pipeline_mode = #tpu.pipeline_mode<synchronous>, transform_indices = @transform_11, window_bounds = array<i64: 128, 128>}, {pipeline_mode = #tpu.pipeline_mode<synchronous>, transform_indices = @transform_12, window_bounds = array<i64: 1, 128>}, {pipeline_mode = #tpu.pipeline_mode<synchronous>, transform_indices = @transform_13, window_bounds = array<i64: 2, 128>}]} {
    %c16_i32 = arith.constant 16 : i32
    %0 = arith.muli %arg1, %c16_i32 : i32
    %1 = tpu.assume_multiple %0, 16 : i32
    %2 = arith.index_cast %1 : i32 to index
    %c0 = arith.constant 0 : index
    %3 = vector.load %arg2[%2, %c0] : memref<16x16xbf16, #tpu.memory_space<vmem>>, vector<16x16xbf16>
    %c0_0 = arith.constant 0 : index
    %c0_1 = arith.constant 0 : index
    %c0_2 = arith.constant 0 : index
    %4 = vector.load %arg6[%c0_0, %c0_1, %c0_2] : memref<1x1x128xf32, #tpu.memory_space<vmem>>, vector<1x1x128xf32>
    %5 = vector.shape_cast %4 : vector<1x1x128xf32> to vector<1x128xf32>
    %c0_i32 = arith.constant 0 : i32
    %6 = arith.cmpi eq, %arg0, %c0_i32 : i32
    %7 = arith.extui %6 : i1 to i32
    %c0_i32_3 = arith.constant 0 : i32
    %8 = arith.cmpi ne, %7, %c0_i32_3 : i32
    scf.if %8 {
      %c0_6 = arith.constant 0 : index
      %c0_7 = arith.constant 0 : index
      %15 = vector.load %arg3[%c0_6, %c0_7] : memref<16x128xbf16, #tpu.memory_space<vmem>>, vector<16x128xbf16>
      %cst = arith.constant dense<0.000000e+00> : vector<16x128xf32>
      %16 = tpu.matmul %3, %15, %cst {dimension_numbers = #tpu.dot_dimension_numbers<[1], [0], [0], [1], [0, 0, 1, 1], [], []>} : vector<16x16xbf16>, vector<16x128xbf16>, vector<16x128xf32> -> vector<16x128xf32>
      %17 = vector.broadcast %5 : vector<1x128xf32> to vector<16x128xf32>
      %18 = arith.addf %16, %17 : vector<16x128xf32>
      %cst_8 = arith.constant 0.000000e+00 : f32
      %19 = vector.broadcast %cst_8 : f32 to vector<16x128xf32>
      %20 = arith.maximumf %18, %19 : vector<16x128xf32>
      %21 = arith.truncf %20 : vector<16x128xf32> to vector<16x128xbf16>
      %22 = arith.index_cast %1 : i32 to index
      %c0_9 = arith.constant 0 : index
      %23 = vector.load %arg16[%22, %c0_9] : memref<16x128xbf16, #tpu.memory_space<vmem>>, vector<16x128xbf16>
      tpu.vector_store %arg16[%22, %c0_9], %21 {strides = array<i32>} : memref<16x128xbf16, #tpu.memory_space<vmem>>, vector<16x128xbf16>,
    } else {
    }
    %c1_i32 = arith.constant 1 : i32
    %9 = arith.cmpi eq, %arg0, %c1_i32 : i32
    %10 = arith.extui %9 : i1 to i32
    %c0_i32_4 = arith.constant 0 : i32
    %11 = arith.cmpi ne, %10, %c0_i32_4 : i32
    scf.if %11 {
      %c0_6 = arith.constant 0 : index
      %c0_7 = arith.constant 0 : index
      %15 = vector.load %arg16[%c0_6, %c0_7] : memref<16x128xbf16, #tpu.memory_space<vmem>>, vector<16x128xbf16>
      %cst = arith.constant dense<0.000000e+00> : vector<16x128xf32>
      %16 = tpu.matmul %3, %15, %cst {dimension_numbers = #tpu.dot_dimension_numbers<[1], [0], [0], [1], [0, 0, 1, 1], [], []>} : vector<16x16xbf16>, vector<16x128xbf16>, vector<16x128xf32> -> vector<16x128xf32>
      %17 = arith.truncf %16 : vector<16x128xf32> to vector<16x128xbf16>
      %c0_8 = arith.constant 0 : index
      %c0_9 = arith.constant 0 : index
      %18 = vector.load %arg4[%c0_8, %c0_9] : memref<128x128xbf16, #tpu.memory_space<vmem>>, vector<128x128xbf16>
      %cst_10 = arith.constant dense<0.000000e+00> : vector<16x128xf32>
      %19 = tpu.matmul %17, %18, %cst_10 {dimension_numbers = #tpu.dot_dimension_numbers<[1], [0], [0], [1], [0, 0, 1, 1], [], []>} : vector<16x128xbf16>, vector<128x128xbf16>, vector<16x128xf32> -> vector<16x128xf32>
      %20 = vector.broadcast %5 : vector<1x128xf32> to vector<16x128xf32>
      %21 = arith.addf %19, %20 : vector<16x128xf32>
      %cst_11 = arith.constant 0.000000e+00 : f32
      %22 = vector.broadcast %cst_11 : f32 to vector<16x128xf32>
      %23 = arith.maximumf %21, %22 : vector<16x128xf32>
      %24 = arith.truncf %23 : vector<16x128xf32> to vector<16x128xbf16>
      %25 = arith.index_cast %1 : i32 to index
      %c0_12 = arith.constant 0 : index
      %26 = vector.load %arg17[%25, %c0_12] : memref<16x128xbf16, #tpu.memory_space<vmem>>, vector<16x128xbf16>
      tpu.vector_store %arg17[%25, %c0_12], %24 {strides = array<i32>} : memref<16x128xbf16, #tpu.memory_space<vmem>>, vector<16x128xbf16>,
    } else {
    }
    %c2_i32 = arith.constant 2 : i32
    %12 = arith.cmpi eq, %arg0, %c2_i32 : i32
    %13 = arith.extui %12 : i1 to i32
    %c0_i32_5 = arith.constant 0 : i32
    %14 = arith.cmpi ne, %13, %c0_i32_5 : i32
    scf.if %14 {
      %c0_6 = arith.constant 0 : index
      %c0_7 = arith.constant 0 : index
      %15 = vector.load %arg17[%c0_6, %c0_7] : memref<16x128xbf16, #tpu.memory_space<vmem>>, vector<16x128xbf16>
      %cst = arith.constant dense<0.000000e+00> : vector<16x128xf32>
      %16 = tpu.matmul %3, %15, %cst {dimension_numbers = #tpu.dot_dimension_numbers<[1], [0], [0], [1], [0, 0, 1, 1], [], []>} : vector<16x16xbf16>, vector<16x128xbf16>, vector<16x128xf32> -> vector<16x128xf32>
      %17 = arith.truncf %16 : vector<16x128xf32> to vector<16x128xbf16>
      %c0_8 = arith.constant 0 : index
      %c0_9 = arith.constant 0 : index
      %18 = vector.load %arg5[%c0_8, %c0_9] : memref<128x128xbf16, #tpu.memory_space<vmem>>, vector<128x128xbf16>
      %cst_10 = arith.constant dense<0.000000e+00> : vector<16x128xf32>
      %19 = tpu.matmul %17, %18, %cst_10 {dimension_numbers = #tpu.dot_dimension_numbers<[1], [0], [0], [1], [0, 0, 1, 1], [], []>} : vector<16x128xbf16>, vector<128x128xbf16>, vector<16x128xf32> -> vector<16x128xf32>
      %20 = vector.broadcast %5 : vector<1x128xf32> to vector<16x128xf32>
      %21 = arith.addf %19, %20 : vector<16x128xf32>
      %cst_11 = arith.constant 0.000000e+00 : f32
      %22 = vector.broadcast %cst_11 : f32 to vector<16x128xf32>
      %23 = arith.maximumf %21, %22 : vector<16x128xf32>
      %c0_i32_12 = arith.constant 0 : i32
      %24 = arith.cmpi eq, %arg1, %c0_i32_12 : i32
      %25 = arith.extui %24 : i1 to i32
      %c0_i32_13 = arith.constant 0 : i32
      %26 = arith.cmpi ne, %25, %c0_i32_13 : i32
      scf.if %26 {
        %cst_31 = arith.constant 0.000000e+00 : f32
        %52 = vector.broadcast %cst_31 : f32 to vector<2x128xf32>
        %c0_32 = arith.constant 0 : index
        %c0_33 = arith.constant 0 : index
        %53 = vector.load %arg18[%c0_32, %c0_33] : memref<2x128xf32, #tpu.memory_space<vmem>>, vector<2x128xf32>
        tpu.vector_store %arg18[%c0_32, %c0_33], %52 {strides = array<i32>} : memref<2x128xf32, #tpu.memory_space<vmem>>, vector<2x128xf32>,
        %cst_34 = arith.constant 0.000000e+00 : f32
        %54 = vector.broadcast %cst_34 : f32 to vector<2x128xf32>
        %c0_35 = arith.constant 0 : index
        %c0_36 = arith.constant 0 : index
        %55 = vector.load %arg19[%c0_35, %c0_36] : memref<2x128xf32, #tpu.memory_space<vmem>>, vector<2x128xf32>
        tpu.vector_store %arg19[%c0_35, %c0_36], %54 {strides = array<i32>} : memref<2x128xf32, #tpu.memory_space<vmem>>, vector<2x128xf32>,
      } else {
      }
      %c0_14 = arith.constant 0 : index
      %c0_15 = arith.constant 0 : index
      %27 = vector.load %arg18[%c0_14, %c0_15] : memref<2x128xf32, #tpu.memory_space<vmem>>, vector<2x128xf32>
      %c0_16 = arith.constant 0 : index
      %c0_17 = arith.constant 0 : index
      %28 = vector.load %arg7[%c0_16, %c0_17] : memref<2x16xbf16, #tpu.memory_space<vmem>>, vector<2x16xbf16>
      %29 = arith.truncf %23 : vector<16x128xf32> to vector<16x128xbf16>
      %cst_18 = arith.constant dense<0.000000e+00> : vector<2x128xf32>
      %30 = tpu.matmul %28, %29, %cst_18 {dimension_numbers = #tpu.dot_dimension_numbers<[1], [0], [0], [1], [0, 0, 1, 1], [], []>} : vector<2x16xbf16>, vector<16x128xbf16>, vector<2x128xf32> -> vector<2x128xf32>
      %31 = arith.addf %27, %30 : vector<2x128xf32>
      %c0_19 = arith.constant 0 : index
      %c0_20 = arith.constant 0 : index
      %32 = vector.load %arg18[%c0_19, %c0_20] : memref<2x128xf32, #tpu.memory_space<vmem>>, vector<2x128xf32>
      tpu.vector_store %arg18[%c0_19, %c0_20], %31 {strides = array<i32>} : memref<2x128xf32, #tpu.memory_space<vmem>>, vector<2x128xf32>,
      %c0_21 = arith.constant 0 : index
      %c0_22 = arith.constant 0 : index
      %33 = vector.load %arg8[%c0_21, %c0_22] : memref<16x2xbf16, #tpu.memory_space<vmem>>, vector<16x2xbf16>
      %34 = arith.extf %33 : vector<16x2xbf16> to vector<16x2xf32>
      %35 = vector.extract_strided_slice %34 {offsets = [0, 0], sizes = [16, 1], strides = [1, 1]} : vector<16x2xf32> to vector<16x1xf32>
      %36 = vector.broadcast %35 : vector<16x1xf32> to vector<16x128xf32>
      %37 = arith.mulf %23, %36 : vector<16x128xf32>
      %cst_23 = arith.constant dense<0xFF800000> : vector<128xf32>
      %38 = vector.multi_reduction <maximumf>, %37, %cst_23 [0] : vector<16x128xf32> to vector<128xf32>
      %39 = vector.shape_cast %38 : vector<128xf32> to vector<1x128xf32>
      %40 = vector.extract_strided_slice %34 {offsets = [0, 1], sizes = [16, 1], strides = [1, 1]} : vector<16x2xf32> to vector<16x1xf32>
      %41 = vector.broadcast %40 : vector<16x1xf32> to vector<16x128xf32>
      %42 = arith.mulf %23, %41 : vector<16x128xf32>
      %cst_24 = arith.constant dense<0xFF800000> : vector<128xf32>
      %43 = vector.multi_reduction <maximumf>, %42, %cst_24 [0] : vector<16x128xf32> to vector<128xf32>
      %44 = vector.shape_cast %43 : vector<128xf32> to vector<1x128xf32>
      %c0_25 = arith.constant 0 : index
      %c0_26 = arith.constant 0 : index
      %45 = vector.load %arg19[%c0_25, %c0_26] : memref<2x128xf32, #tpu.memory_space<vmem>>, vector<2x128xf32>
      %46 = tpu.concatenate %39, %44 in 0 : vector<1x128xf32>, vector<1x128xf32> -> vector<2x128xf32>
      %47 = arith.maximumf %45, %46 : vector<2x128xf32>
      %c0_27 = arith.constant 0 : index
      %c0_28 = arith.constant 0 : index
      %48 = vector.load %arg19[%c0_27, %c0_28] : memref<2x128xf32, #tpu.memory_space<vmem>>, vector<2x128xf32>
      tpu.vector_store %arg19[%c0_27, %c0_28], %47 {strides = array<i32>} : memref<2x128xf32, #tpu.memory_space<vmem>>, vector<2x128xf32>,
      %c0_i32_29 = arith.constant 0 : i32
      %49 = arith.cmpi eq, %arg1, %c0_i32_29 : i32
      %50 = arith.extui %49 : i1 to i32
      %c0_i32_30 = arith.constant 0 : i32
      %51 = arith.cmpi ne, %50, %c0_i32_30 : i32
      scf.if %51 {
        %c0_31 = arith.constant 0 : index
        %c0_32 = arith.constant 0 : index
        %52 = vector.load %arg18[%c0_31, %c0_32] : memref<2x128xf32, #tpu.memory_space<vmem>>, vector<2x128xf32>
        %c0_33 = arith.constant 0 : index
        %c0_34 = arith.constant 0 : index
        %53 = vector.load %arg9[%c0_33, %c0_34] : memref<2x1xf32, #tpu.memory_space<vmem>>, vector<2x1xf32>
        %54 = vector.broadcast %53 : vector<2x1xf32> to vector<2x128xf32>
        %55 = arith.mulf %52, %54 : vector<2x128xf32>
        %56 = arith.truncf %55 : vector<2x128xf32> to vector<2x128xbf16>
        %c0_35 = arith.constant 0 : index
        %c0_36 = arith.constant 0 : index
        %57 = vector.load %arg19[%c0_35, %c0_36] : memref<2x128xf32, #tpu.memory_space<vmem>>, vector<2x128xf32>
        %58 = arith.truncf %57 : vector<2x128xf32> to vector<2x128xbf16>
        %c0_37 = arith.constant 0 : index
        %c0_38 = arith.constant 0 : index
        %59 = vector.load %arg10[%c0_37, %c0_38] : memref<128x128xbf16, #tpu.memory_space<vmem>>, vector<128x128xbf16>
        %cst_39 = arith.constant dense<0.000000e+00> : vector<2x128xf32>
        %60 = tpu.matmul %56, %59, %cst_39 {dimension_numbers = #tpu.dot_dimension_numbers<[1], [0], [0], [1], [0, 0, 1, 1], [], []>} : vector<2x128xbf16>, vector<128x128xbf16>, vector<2x128xf32> -> vector<2x128xf32>
        %c0_40 = arith.constant 0 : index
        %c0_41 = arith.constant 0 : index
        %61 = vector.load %arg11[%c0_40, %c0_41] : memref<128x128xbf16, #tpu.memory_space<vmem>>, vector<128x128xbf16>
        %cst_42 = arith.constant dense<0.000000e+00> : vector<2x128xf32>
        %62 = tpu.matmul %58, %61, %cst_42 {dimension_numbers = #tpu.dot_dimension_numbers<[1], [0], [0], [1], [0, 0, 1, 1], [], []>} : vector<2x128xbf16>, vector<128x128xbf16>, vector<2x128xf32> -> vector<2x128xf32>
        %63 = arith.addf %60, %62 : vector<2x128xf32>
        %c0_43 = arith.constant 0 : index
        %c0_44 = arith.constant 0 : index
        %64 = vector.load %arg12[%c0_43, %c0_44] : memref<1x128xf32, #tpu.memory_space<vmem>>, vector<1x128xf32>
        %65 = vector.broadcast %64 : vector<1x128xf32> to vector<2x128xf32>
        %66 = arith.addf %63, %65 : vector<2x128xf32>
        %cst_45 = arith.constant 0.000000e+00 : f32
        %67 = vector.broadcast %cst_45 : f32 to vector<2x128xf32>
        %68 = arith.maximumf %66, %67 : vector<2x128xf32>
        %69 = arith.truncf %68 : vector<2x128xf32> to vector<2x128xbf16>
        %c0_46 = arith.constant 0 : index
        %c0_47 = arith.constant 0 : index
        %70 = vector.load %arg13[%c0_46, %c0_47] : memref<128x128xbf16, #tpu.memory_space<vmem>>, vector<128x128xbf16>
        %cst_48 = arith.constant dense<0.000000e+00> : vector<2x128xf32>
        %71 = tpu.matmul %69, %70, %cst_48 {dimension_numbers = #tpu.dot_dimension_numbers<[1], [0], [0], [1], [0, 0, 1, 1], [], []>} : vector<2x128xbf16>, vector<128x128xbf16>, vector<2x128xf32> -> vector<2x128xf32>
        %c0_49 = arith.constant 0 : index
        %c0_50 = arith.constant 0 : index
        %72 = vector.load %arg14[%c0_49, %c0_50] : memref<1x128xf32, #tpu.memory_space<vmem>>, vector<1x128xf32>
        %73 = vector.broadcast %72 : vector<1x128xf32> to vector<2x128xf32>
        %74 = arith.addf %71, %73 : vector<2x128xf32>
        %c0_51 = arith.constant 0 : index
        %c0_52 = arith.constant 0 : index
        %75 = vector.load %arg15[%c0_51, %c0_52] : memref<2x128xf32, #tpu.memory_space<vmem>>, vector<2x128xf32>
        tpu.vector_store %arg15[%c0_51, %c0_52], %74 {strides = array<i32>} : memref<2x128xf32, #tpu.memory_space<vmem>>, vector<2x128xf32>,
      } else {
      }
    } else {
    }
    return
  }
  func.func @transform_0(%arg0: i32, %arg1: i32) -> (i32, i32) {
    %c0_i32 = arith.constant 0 : i32
    %c0_i32_0 = arith.constant 0 : i32
    %c0_i32_1 = arith.constant 0 : i32
    return %c0_i32, %c0_i32_0 : i32, i32
  }
  func.func @transform_1(%arg0: i32, %arg1: i32) -> (i32, i32) {
    %c0_i32 = arith.constant 0 : i32
    %c0_i32_0 = arith.constant 0 : i32
    %c0_i32_1 = arith.constant 0 : i32
    return %c0_i32, %c0_i32_0 : i32, i32
  }
  func.func @transform_2(%arg0: i32, %arg1: i32) -> (i32, i32) {
    %c0_i32 = arith.constant 0 : i32
    %c0_i32_0 = arith.constant 0 : i32
    %c0_i32_1 = arith.constant 0 : i32
    return %c0_i32, %c0_i32_0 : i32, i32
  }
  func.func @transform_3(%arg0: i32, %arg1: i32) -> (i32, i32) {
    %c0_i32 = arith.constant 0 : i32
    %c0_i32_0 = arith.constant 0 : i32
    %c0_i32_1 = arith.constant 0 : i32
    return %c0_i32, %c0_i32_0 : i32, i32
  }
  func.func @transform_4(%arg0: i32, %arg1: i32) -> (i32, i32, i32) {
    %c0_i32 = arith.constant 0 : i32
    %c0_i32_0 = arith.constant 0 : i32
    %c0_i32_1 = arith.constant 0 : i32
    return %arg0, %c0_i32, %c0_i32_0 : i32, i32, i32
  }
  func.func @transform_5(%arg0: i32, %arg1: i32) -> (i32, i32) {
    %c0_i32 = arith.constant 0 : i32
    %c0_i32_0 = arith.constant 0 : i32
    return %c0_i32, %arg1 : i32, i32
  }
  func.func @transform_6(%arg0: i32, %arg1: i32) -> (i32, i32) {
    %c0_i32 = arith.constant 0 : i32
    %c0_i32_0 = arith.constant 0 : i32
    return %arg1, %c0_i32 : i32, i32
  }
  func.func @transform_7(%arg0: i32, %arg1: i32) -> (i32, i32) {
    %c0_i32 = arith.constant 0 : i32
    %c0_i32_0 = arith.constant 0 : i32
    %c0_i32_1 = arith.constant 0 : i32
    return %c0_i32, %c0_i32_0 : i32, i32
  }
  func.func @transform_8(%arg0: i32, %arg1: i32) -> (i32, i32) {
    %c0_i32 = arith.constant 0 : i32
    %c0_i32_0 = arith.constant 0 : i32
    %c0_i32_1 = arith.constant 0 : i32
    return %c0_i32, %c0_i32_0 : i32, i32
  }
  func.func @transform_9(%arg0: i32, %arg1: i32) -> (i32, i32) {
    %c0_i32 = arith.constant 0 : i32
    %c0_i32_0 = arith.constant 0 : i32
    %c0_i32_1 = arith.constant 0 : i32
    return %c0_i32, %c0_i32_0 : i32, i32
  }
  func.func @transform_10(%arg0: i32, %arg1: i32) -> (i32, i32) {
    %c0_i32 = arith.constant 0 : i32
    %c0_i32_0 = arith.constant 0 : i32
    %c0_i32_1 = arith.constant 0 : i32
    return %c0_i32, %c0_i32_0 : i32, i32
  }
  func.func @transform_11(%arg0: i32, %arg1: i32) -> (i32, i32) {
    %c0_i32 = arith.constant 0 : i32
    %c0_i32_0 = arith.constant 0 : i32
    %c0_i32_1 = arith.constant 0 : i32
    return %c0_i32, %c0_i32_0 : i32, i32
  }
  func.func @transform_12(%arg0: i32, %arg1: i32) -> (i32, i32) {
    %c0_i32 = arith.constant 0 : i32
    %c0_i32_0 = arith.constant 0 : i32
    %c0_i32_1 = arith.constant 0 : i32
    return %c0_i32, %c0_i32_0 : i32, i32
  }
  func.func @transform_13(%arg0: i32, %arg1: i32) -> (i32, i32) {
    %c0_i32 = arith.constant 0 : i32
    %c0_i32_0 = arith.constant 0 : i32
    %c0_i32_1 = arith.constant 0 : i32
    return %c0_i32, %c0_i32_0 : i32, i32
  }
}

</mosaic_0001>

<llo_original>
// kernel: simple_gcn_forward.1
$region0: #{simple_gcn_forward.1}
  #allocation0 [shape = 'u32[]', space=smem, size = 0x4, offset = 0x4, fixed_abs, tag = 'smem constant byte address 0x4 - core index']
  #allocation1 [shape = 'u32[144,128]{1,0:T(1,128)}', space=vmem, size = 0x12000, scoped, tag = 'internal scratch']
  #allocation2 [shape = 'bf16[16,128]{1,0:T(16,128)(2,1)}', space=vmem, size = 0x1000, scoped, tag = 'scratch operand']
  #allocation3 [shape = 'bf16[16,128]{1,0:T(16,128)(2,1)}', space=vmem, size = 0x1000, scoped, tag = 'scratch operand']
  #allocation4 [shape = 'f32[2,128]{1,0:T(2,128)}', space=vmem, size = 0x400, scoped, tag = 'scratch operand']
  #allocation5 [shape = 'f32[2,128]{1,0:T(2,128)}', space=vmem, size = 0x400, scoped, tag = 'scratch operand']
  %s0 = inlined_call_operand.vmem [shape: bf16[16,16], index: 0, kind: input, shape index: {}]
  %s1 = inlined_call_operand.vmem [shape: bf16[16,128], index: 1, kind: input, shape index: {}]
  %s2 = inlined_call_operand.vmem [shape: bf16[128,128], index: 2, kind: input, shape index: {}]
  %s3 = inlined_call_operand.vmem [shape: bf16[128,128], index: 3, kind: input, shape index: {}]
  %s4 = inlined_call_operand.vmem [shape: f32[3,1,128], index: 4, kind: input, shape index: {}]
  %s5 = inlined_call_operand.vmem [shape: bf16[2,16], index: 5, kind: input, shape index: {}]
  %s6 = inlined_call_operand.vmem [shape: bf16[16,2], index: 6, kind: input, shape index: {}]
  %s7 = inlined_call_operand.vmem [shape: f32[2,1], index: 7, kind: input, shape index: {}]
  %s8 = inlined_call_operand.vmem [shape: bf16[128,128], index: 8, kind: input, shape index: {}]
  %s9 = inlined_call_operand.vmem [shape: bf16[128,128], index: 9, kind: input, shape index: {}]
  %s10 = inlined_call_operand.vmem [shape: f32[1,128], index: 10, kind: input, shape index: {}]
  %s11 = inlined_call_operand.vmem [shape: bf16[128,128], index: 11, kind: input, shape index: {}]
  %s12 = inlined_call_operand.vmem [shape: f32[1,128], index: 12, kind: input, shape index: {}]
  %s13 = inlined_call_operand.hbm [shape: f32[2,128], index: 13, kind: output, shape index: {}]
  %s14 = sld [smem:[#allocation0]]
  $region105: #{simple_gcn_forward.1} parent=0
    _
  %s16 = ssub.s32 1, %s14
  %s17 = scalar_select 0, %s16, %s14
  $region1: #{simple_gcn_forward.1} parent=0
    #allocation6 [shape = 'u8[1024]{0}', space=vmem, size = 0x400, scoped, tag = 'output window, operand 0, single buffered']
    #allocation7 [shape = 's32[2]{0}', space=sflag, size = 0x8, scoped, tag = 'scoped memory for simple_gcn_forward.1']
    %18 = vsyncpa [#allocation7], 0
    loop: start=0, step=1, limit=5
    $region2: #{simple_gcn_forward.1} parent=1 // loop_pre_header
      _
    $region3: #{simple_gcn_forward.1} parent=1 // loop_header
      %s20 = sphi 0, %s24
      %p21 = scmp.ge.s32.totalorder %s20, 5
      %s27 = sphi 0, %s39
      %s28 = sphi 0, %s35
      %s29 = sphi 0, %s27
      %s30 = sphi 0, %s28
      %s31 = sphi 0, %s29
      %s32 = sphi 0, %s30
      %s40 = sphi 0, %s40
      %s42 = sphi 0, %s40
      %s43 = sphi 0, %s42
      %s57 = sphi 0, %s43
      %s61 = sphi 0, %s61
      %s63 = sphi 0, %s61
      %s64 = sphi 0, %s63
      %s78 = sphi 0, %s64
      %s82 = sphi 0, %s82
      %s84 = sphi 0, %s82
      %s85 = sphi 0, %s84
      %s99 = sphi 0, %s85
      %s103 = sphi 0, %s103
      %s105 = sphi 0, %s103
      %s106 = sphi 0, %s105
      %s120 = sphi 0, %s106
      %s126 = sphi 0, %s128
      %s129 = sphi 0, %s126
      %s130 = sphi 0, %s129
      %s146 = sphi 0, %s130
      %s152 = sphi 0, %s154
      %s155 = sphi 0, %s152
      %s156 = sphi 0, %s155
      %s172 = sphi 0, %s156
      %s178 = sphi 0, %s180
      %s181 = sphi 0, %s178
      %s182 = sphi 0, %s181
      %s198 = sphi 0, %s182
      %s202 = sphi 0, %s202
      %s204 = sphi 0, %s202
      %s205 = sphi 0, %s204
      %s219 = sphi 0, %s205
      %s223 = sphi 0, %s223
      %s225 = sphi 0, %s223
      %s226 = sphi 0, %s225
      %s240 = sphi 0, %s226
      %s244 = sphi 0, %s244
      %s246 = sphi 0, %s244
      %s247 = sphi 0, %s246
      %s261 = sphi 0, %s247
      %s265 = sphi 0, %s265
      %s267 = sphi 0, %s265
      %s268 = sphi 0, %s267
      %s282 = sphi 0, %s268
      %s286 = sphi 0, %s286
      %s288 = sphi 0, %s286
      %s289 = sphi 0, %s288
      %s303 = sphi 0, %s289
      %s307 = sphi 0, %s307
      %s309 = sphi 0, %s307
      %s310 = sphi 0, %s309
      %s324 = sphi 0, %s310
      %s328 = sphi 0, %s328
      %s330 = sphi 0, %s328
      %s331 = sphi 0, %s330
      %s345 = sphi 0, %s331
    $region4: #{simple_gcn_forward.1} parent=1 // loop_header_branch
      %23 = sbr.rel (%p21) target = $region8
    $region5: #{simple_gcn_forward.1} parent=1 // loop_body
      %s25 = ssub.s32 %s20, 1
      %s26 = ssub.s32 %s20, 2
      %s33 = sadd.s32 1, %s28
      %p34 = scmp.ge.s32.totalorder %s33, 1
      %s35 = scalar_select %p34, 0, %s33
      %s36 = sadd.s32 1, %s27
      %s37 = scalar_select %p34, %s36, %s27
      %p38 = scmp.ge.s32.totalorder %s37, 3
      %s39 = scalar_select %p38, 0, %s37
      %s41 = sadd.s32 %s40, 1
      %p44 = scmp.eq.s32.totalorder %s20, 2
      %p45 = scmp.ne.s32.totalorder %s40, %s42
      %p46 = scmp.eq.s32.totalorder %s20, 0
      %p47 = por %p45, %p46
      %p48 = scmp.ne.s32.totalorder %s40, %s42
      %p49 = scmp.eq.s32.totalorder %s25, 2
      %p50 = por %p48, %p49
      %p51 = scmp.ne.s32.totalorder %s42, %s43
      %p52 = scmp.eq.s32.totalorder %s25, 0
      %p53 = por %p51, %p52
      %p54 = scmp.ne.s32.totalorder %s42, %s43
      %p55 = scmp.eq.s32.totalorder %s26, 2
      %p56 = por %p54, %p55
      %p58 = scmp.ne.s32.totalorder %s43, %s57
      %p59 = scmp.eq.s32.totalorder %s26, 0
      %p60 = por %p58, %p59
      %s62 = sadd.s32 %s61, 1
      %p65 = scmp.eq.s32.totalorder %s20, 2
      %p66 = scmp.ne.s32.totalorder %s61, %s63
      %p67 = scmp.eq.s32.totalorder %s20, 0
      %p68 = por %p66, %p67
      %p69 = scmp.ne.s32.totalorder %s61, %s63
      %p70 = scmp.eq.s32.totalorder %s25, 2
      %p71 = por %p69, %p70
      %p72 = scmp.ne.s32.totalorder %s63, %s64
      %p73 = scmp.eq.s32.totalorder %s25, 0
      %p74 = por %p72, %p73
      %p75 = scmp.ne.s32.totalorder %s63, %s64
      %p76 = scmp.eq.s32.totalorder %s26, 2
      %p77 = por %p75, %p76
      %p79 = scmp.ne.s32.totalorder %s64, %s78
      %p80 = scmp.eq.s32.totalorder %s26, 0
      %p81 = por %p79, %p80
      %s83 = sadd.s32 %s82, 1
      %p86 = scmp.eq.s32.totalorder %s20, 2
      %p87 = scmp.ne.s32.totalorder %s82, %s84
      %p88 = scmp.eq.s32.totalorder %s20, 0
      %p89 = por %p87, %p88
      %p90 = scmp.ne.s32.totalorder %s82, %s84
      %p91 = scmp.eq.s32.totalorder %s25, 2
      %p92 = por %p90, %p91
      %p93 = scmp.ne.s32.totalorder %s84, %s85
      %p94 = scmp.eq.s32.totalorder %s25, 0
      %p95 = por %p93, %p94
      %p96 = scmp.ne.s32.totalorder %s84, %s85
      %p97 = scmp.eq.s32.totalorder %s26, 2
      %p98 = por %p96, %p97
      %p100 = scmp.ne.s32.totalorder %s85, %s99
      %p101 = scmp.eq.s32.totalorder %s26, 0
      %p102 = por %p100, %p101
      %s104 = sadd.s32 %s103, 1
      %p107 = scmp.eq.s32.totalorder %s20, 2
      %p108 = scmp.ne.s32.totalorder %s103, %s105
      %p109 = scmp.eq.s32.totalorder %s20, 0
      %p110 = por %p108, %p109
      %p111 = scmp.ne.s32.totalorder %s103, %s105
      %p112 = scmp.eq.s32.totalorder %s25, 2
      %p113 = por %p111, %p112
      %p114 = scmp.ne.s32.totalorder %s105, %s106
      %p115 = scmp.eq.s32.totalorder %s25, 0
      %p116 = por %p114, %p115
      %p117 = scmp.ne.s32.totalorder %s105, %s106
      %p118 = scmp.eq.s32.totalorder %s26, 2
      %p119 = por %p117, %p118
      %p121 = scmp.ne.s32.totalorder %s106, %s120
      %p122 = scmp.eq.s32.totalorder %s26, 0
      %p123 = por %p121, %p122
      %s124 = ssub.s32 %s27, %s39
      %p125 = scmp.eq.s32.totalorder %s124, 0
      %s127 = sadd.s32 %s126, 1
      %s128 = scalar_select %p125, %s126, %s127
      %p131 = pneg %p125
      %p132 = scmp.eq.s32.totalorder %s20, 2
      %p133 = por %p131, %p132
      %p134 = scmp.ne.s32.totalorder %s126, %s129
      %p135 = scmp.eq.s32.totalorder %s20, 0
      %p136 = por %p134, %p135
      %p137 = scmp.ne.s32.totalorder %s126, %s129
      %p138 = scmp.eq.s32.totalorder %s25, 2
      %p139 = por %p137, %p138
      %p140 = scmp.ne.s32.totalorder %s129, %s130
      %p141 = scmp.eq.s32.totalorder %s25, 0
      %p142 = por %p140, %p141
      %p143 = scmp.ne.s32.totalorder %s129, %s130
      %p144 = scmp.eq.s32.totalorder %s26, 2
      %p145 = por %p143, %p144
      %p147 = scmp.ne.s32.totalorder %s130, %s146
      %p148 = scmp.eq.s32.totalorder %s26, 0
      %p149 = por %p147, %p148
      %s150 = ssub.s32 %s28, %s35
      %p151 = scmp.eq.s32.totalorder %s150, 0
      %s153 = sadd.s32 %s152, 1
      %s154 = scalar_select %p151, %s152, %s153
      %p157 = pneg %p151
      %p158 = scmp.eq.s32.totalorder %s20, 2
      %p159 = por %p157, %p158
      %p160 = scmp.ne.s32.totalorder %s152, %s155
      %p161 = scmp.eq.s32.totalorder %s20, 0
      %p162 = por %p160, %p161
      %p163 = scmp.ne.s32.totalorder %s152, %s155
      %p164 = scmp.eq.s32.totalorder %s25, 2
      %p165 = por %p163, %p164
      %p166 = scmp.ne.s32.totalorder %s155, %s156
      %p167 = scmp.eq.s32.totalorder %s25, 0
      %p168 = por %p166, %p167
      %p169 = scmp.ne.s32.totalorder %s155, %s156
      %p170 = scmp.eq.s32.totalorder %s26, 2
      %p171 = por %p169, %p170
      %p173 = scmp.ne.s32.totalorder %s156, %s172
      %p174 = scmp.eq.s32.totalorder %s26, 0
      %p175 = por %p173, %p174
      %s176 = ssub.s32 %s28, %s35
      %p177 = scmp.eq.s32.totalorder %s176, 0
      %s179 = sadd.s32 %s178, 1
      %s180 = scalar_select %p177, %s178, %s179
      %p183 = pneg %p177
      %p184 = scmp.eq.s32.totalorder %s20, 2
      %p185 = por %p183, %p184
      %p186 = scmp.ne.s32.totalorder %s178, %s181
      %p187 = scmp.eq.s32.totalorder %s20, 0
      %p188 = por %p186, %p187
      %p189 = scmp.ne.s32.totalorder %s178, %s181
      %p190 = scmp.eq.s32.totalorder %s25, 2
      %p191 = por %p189, %p190
      %p192 = scmp.ne.s32.totalorder %s181, %s182
      %p193 = scmp.eq.s32.totalorder %s25, 0
      %p194 = por %p192, %p193
      %p195 = scmp.ne.s32.totalorder %s181, %s182
      %p196 = scmp.eq.s32.totalorder %s26, 2
      %p197 = por %p195, %p196
      %p199 = scmp.ne.s32.totalorder %s182, %s198
      %p200 = scmp.eq.s32.totalorder %s26, 0
      %p201 = por %p199, %p200
      %s203 = sadd.s32 %s202, 1
      %p206 = scmp.eq.s32.totalorder %s20, 2
      %p207 = scmp.ne.s32.totalorder %s202, %s204
      %p208 = scmp.eq.s32.totalorder %s20, 0
      %p209 = por %p207, %p208
      %p210 = scmp.ne.s32.totalorder %s202, %s204
      %p211 = scmp.eq.s32.totalorder %s25, 2
      %p212 = por %p210, %p211
      %p213 = scmp.ne.s32.totalorder %s204, %s205
      %p214 = scmp.eq.s32.totalorder %s25, 0
      %p215 = por %p213, %p214
      %p216 = scmp.ne.s32.totalorder %s204, %s205
      %p217 = scmp.eq.s32.totalorder %s26, 2
      %p218 = por %p216, %p217
      %p220 = scmp.ne.s32.totalorder %s205, %s219
      %p221 = scmp.eq.s32.totalorder %s26, 0
      %p222 = por %p220, %p221
      %s224 = sadd.s32 %s223, 1
      %p227 = scmp.eq.s32.totalorder %s20, 2
      %p228 = scmp.ne.s32.totalorder %s223, %s225
      %p229 = scmp.eq.s32.totalorder %s20, 0
      %p230 = por %p228, %p229
      %p231 = scmp.ne.s32.totalorder %s223, %s225
      %p232 = scmp.eq.s32.totalorder %s25, 2
      %p233 = por %p231, %p232
      %p234 = scmp.ne.s32.totalorder %s225, %s226
      %p235 = scmp.eq.s32.totalorder %s25, 0
      %p236 = por %p234, %p235
      %p237 = scmp.ne.s32.totalorder %s225, %s226
      %p238 = scmp.eq.s32.totalorder %s26, 2
      %p239 = por %p237, %p238
      %p241 = scmp.ne.s32.totalorder %s226, %s240
      %p242 = scmp.eq.s32.totalorder %s26, 0
      %p243 = por %p241, %p242
      %s245 = sadd.s32 %s244, 1
      %p248 = scmp.eq.s32.totalorder %s20, 2
      %p249 = scmp.ne.s32.totalorder %s244, %s246
      %p250 = scmp.eq.s32.totalorder %s20, 0
      %p251 = por %p249, %p250
      %p252 = scmp.ne.s32.totalorder %s244, %s246
      %p253 = scmp.eq.s32.totalorder %s25, 2
      %p254 = por %p252, %p253
      %p255 = scmp.ne.s32.totalorder %s246, %s247
      %p256 = scmp.eq.s32.totalorder %s25, 0
      %p257 = por %p255, %p256
      %p258 = scmp.ne.s32.totalorder %s246, %s247
      %p259 = scmp.eq.s32.totalorder %s26, 2
      %p260 = por %p258, %p259
      %p262 = scmp.ne.s32.totalorder %s247, %s261
      %p263 = scmp.eq.s32.totalorder %s26, 0
      %p264 = por %p262, %p263
      %s266 = sadd.s32 %s265, 1
      %p269 = scmp.eq.s32.totalorder %s20, 2
      %p270 = scmp.ne.s32.totalorder %s265, %s267
      %p271 = scmp.eq.s32.totalorder %s20, 0
      %p272 = por %p270, %p271
      %p273 = scmp.ne.s32.totalorder %s265, %s267
      %p274 = scmp.eq.s32.totalorder %s25, 2
      %p275 = por %p273, %p274
      %p276 = scmp.ne.s32.totalorder %s267, %s268
      %p277 = scmp.eq.s32.totalorder %s25, 0
      %p278 = por %p276, %p277
      %p279 = scmp.ne.s32.totalorder %s267, %s268
      %p280 = scmp.eq.s32.totalorder %s26, 2
      %p281 = por %p279, %p280
      %p283 = scmp.ne.s32.totalorder %s268, %s282
      %p284 = scmp.eq.s32.totalorder %s26, 0
      %p285 = por %p283, %p284
      %s287 = sadd.s32 %s286, 1
      %p290 = scmp.eq.s32.totalorder %s20, 2
      %p291 = scmp.ne.s32.totalorder %s286, %s288
      %p292 = scmp.eq.s32.totalorder %s20, 0
      %p293 = por %p291, %p292
      %p294 = scmp.ne.s32.totalorder %s286, %s288
      %p295 = scmp.eq.s32.totalorder %s25, 2
      %p296 = por %p294, %p295
      %p297 = scmp.ne.s32.totalorder %s288, %s289
      %p298 = scmp.eq.s32.totalorder %s25, 0
      %p299 = por %p297, %p298
      %p300 = scmp.ne.s32.totalorder %s288, %s289
      %p301 = scmp.eq.s32.totalorder %s26, 2
      %p302 = por %p300, %p301
      %p304 = scmp.ne.s32.totalorder %s289, %s303
      %p305 = scmp.eq.s32.totalorder %s26, 0
      %p306 = por %p304, %p305
      %s308 = sadd.s32 %s307, 1
      %p311 = scmp.eq.s32.totalorder %s20, 2
      %p312 = scmp.ne.s32.totalorder %s307, %s309
      %p313 = scmp.eq.s32.totalorder %s20, 0
      %p314 = por %p312, %p313
      %p315 = scmp.ne.s32.totalorder %s307, %s309
      %p316 = scmp.eq.s32.totalorder %s25, 2
      %p317 = por %p315, %p316
      %p318 = scmp.ne.s32.totalorder %s309, %s310
      %p319 = scmp.eq.s32.totalorder %s25, 0
      %p320 = por %p318, %p319
      %p321 = scmp.ne.s32.totalorder %s309, %s310
      %p322 = scmp.eq.s32.totalorder %s26, 2
      %p323 = por %p321, %p322
      %p325 = scmp.ne.s32.totalorder %s310, %s324
      %p326 = scmp.eq.s32.totalorder %s26, 0
      %p327 = por %p325, %p326
      %s329 = sadd.s32 %s328, 1
      %p332 = scmp.eq.s32.totalorder %s20, 2
      %p333 = scmp.ne.s32.totalorder %s328, %s330
      %p334 = scmp.eq.s32.totalorder %s20, 0
      %p335 = por %p333, %p334
      %p336 = scmp.ne.s32.totalorder %s328, %s330
      %p337 = scmp.eq.s32.totalorder %s25, 2
      %p338 = por %p336, %p337
      %p339 = scmp.ne.s32.totalorder %s330, %s331
      %p340 = scmp.eq.s32.totalorder %s25, 0
      %p341 = por %p339, %p340
      %p342 = scmp.ne.s32.totalorder %s330, %s331
      %p343 = scmp.eq.s32.totalorder %s26, 2
      %p344 = por %p342, %p343
      %p346 = scmp.ne.s32.totalorder %s331, %s345
      %p347 = scmp.eq.s32.totalorder %s26, 0
      %p348 = por %p346, %p347
      %p349 = scmp.le.s32.totalorder 1, %s20
      %p350 = scmp.lt.s32.totalorder %s20, 4
      %p351 = pnand %p349, %p350
      %p352 = pneg %p351
      // Predicated region
      $region9: #{simple_gcn_forward.1} parent=5 // pred_check
        _
      $region10: #{simple_gcn_forward.1} parent=5 // pred_check_branch
        %354 = sbr.rel (%p351) target = $region12
      $region11: #{simple_gcn_forward.1} parent=5 // pred_region
        %s355 = ssub.s32 %s20, 1
        // Predicated region
        $region13: #{simple_gcn_forward.1} parent=11 // pred_check
          %p356 = pneg %p53
        $region14: #{simple_gcn_forward.1} parent=11 // pred_check_branch
          %358 = sbr.rel (%p356) target = $region16
        $region15: #{simple_gcn_forward.1} parent=11 // pred_region
          _
        $region16: #{simple_gcn_forward.1} parent=11 // pred_fallthru
          _
        // Predicated region
        $region17: #{simple_gcn_forward.1} parent=11 // pred_check
          %p359 = pneg %p74
        $region18: #{simple_gcn_forward.1} parent=11 // pred_check_branch
          %361 = sbr.rel (%p359) target = $region20
        $region19: #{simple_gcn_forward.1} parent=11 // pred_region
          _
        $region20: #{simple_gcn_forward.1} parent=11 // pred_fallthru
          _
        // Predicated region
        $region21: #{simple_gcn_forward.1} parent=11 // pred_check
          %p362 = pneg %p95
        $region22: #{simple_gcn_forward.1} parent=11 // pred_check_branch
          %364 = sbr.rel (%p362) target = $region24
        $region23: #{simple_gcn_forward.1} parent=11 // pred_region
          _
        $region24: #{simple_gcn_forward.1} parent=11 // pred_fallthru
          _
        // Predicated region
        $region25: #{simple_gcn_forward.1} parent=11 // pred_check
          %p365 = pneg %p116
        $region26: #{simple_gcn_forward.1} parent=11 // pred_check_branch
          %367 = sbr.rel (%p365) target = $region28
        $region27: #{simple_gcn_forward.1} parent=11 // pred_region
          _
        $region28: #{simple_gcn_forward.1} parent=11 // pred_fallthru
          _
        // Predicated region
        $region29: #{simple_gcn_forward.1} parent=11 // pred_check
          %p368 = pneg %p168
        $region30: #{simple_gcn_forward.1} parent=11 // pred_check_branch
          %370 = sbr.rel (%p368) target = $region32
        $region31: #{simple_gcn_forward.1} parent=11 // pred_region
          %p371 = scmp.lt.s32.totalorder %s30, 0
          %s372 = scalar_select %p371, %s30, 0
          %s373 = scalar_lea.vmem %s5, %s372
        $region32: #{simple_gcn_forward.1} parent=11 // pred_fallthru
          _
        // Predicated region
        $region33: #{simple_gcn_forward.1} parent=11 // pred_check
          %p374 = pneg %p194
        $region34: #{simple_gcn_forward.1} parent=11 // pred_check_branch
          %376 = sbr.rel (%p374) target = $region36
        $region35: #{simple_gcn_forward.1} parent=11 // pred_region
          %s377 = smul.u32 2, %s30
          %p378 = scmp.lt.s32.totalorder %s377, 1
          %s379 = scalar_select %p378, %s377, 1
          %s380 = smul.addr %s379, 4
          %s381 = scalar_lea.vmem %s6, %s380
          %s382 = smul.u32 2, %s30
        $region36: #{simple_gcn_forward.1} parent=11 // pred_fallthru
          _
        // Predicated region
        $region37: #{simple_gcn_forward.1} parent=11 // pred_check
          %p383 = pneg %p215
        $region38: #{simple_gcn_forward.1} parent=11 // pred_check_branch
          %385 = sbr.rel (%p383) target = $region40
        $region39: #{simple_gcn_forward.1} parent=11 // pred_region
          _
        $region40: #{simple_gcn_forward.1} parent=11 // pred_fallthru
          _
        // Predicated region
        $region41: #{simple_gcn_forward.1} parent=11 // pred_check
          %p386 = pneg %p236
        $region42: #{simple_gcn_forward.1} parent=11 // pred_check_branch
          %388 = sbr.rel (%p386) target = $region44
        $region43: #{simple_gcn_forward.1} parent=11 // pred_region
          _
        $region44: #{simple_gcn_forward.1} parent=11 // pred_fallthru
          _
        // Predicated region
        $region45: #{simple_gcn_forward.1} parent=11 // pred_check
          %p389 = pneg %p257
        $region46: #{simple_gcn_forward.1} parent=11 // pred_check_branch
          %391 = sbr.rel (%p389) target = $region48
        $region47: #{simple_gcn_forward.1} parent=11 // pred_region
          _
        $region48: #{simple_gcn_forward.1} parent=11 // pred_fallthru
          _
        // Predicated region
        $region49: #{simple_gcn_forward.1} parent=11 // pred_check
          %p392 = pneg %p278
        $region50: #{simple_gcn_forward.1} parent=11 // pred_check_branch
          %394 = sbr.rel (%p392) target = $region52
        $region51: #{simple_gcn_forward.1} parent=11 // pred_region
          _
        $region52: #{simple_gcn_forward.1} parent=11 // pred_fallthru
          _
        // Predicated region
        $region53: #{simple_gcn_forward.1} parent=11 // pred_check
          %p395 = pneg %p299
        $region54: #{simple_gcn_forward.1} parent=11 // pred_check_branch
          %397 = sbr.rel (%p395) target = $region56
        $region55: #{simple_gcn_forward.1} parent=11 // pred_region
          _
        $region56: #{simple_gcn_forward.1} parent=11 // pred_fallthru
          _
        // Predicated region
        $region57: #{simple_gcn_forward.1} parent=11 // pred_check
          %p398 = pneg %p320
        $region58: #{simple_gcn_forward.1} parent=11 // pred_check_branch
          %400 = sbr.rel (%p398) target = $region60
        $region59: #{simple_gcn_forward.1} parent=11 // pred_region
          _
        $region60: #{simple_gcn_forward.1} parent=11 // pred_fallthru
          _
      $region12: #{simple_gcn_forward.1} parent=5 // pred_fallthru
        _
      %p401 = scmp.lt.s32.totalorder %s20, 3
      // Predicated region
      $region61: #{simple_gcn_forward.1} parent=5 // pred_check
        %p402 = pneg %p401
      $region62: #{simple_gcn_forward.1} parent=5 // pred_check_branch
        %404 = sbr.rel (%p402) target = $region64
      $region63: #{simple_gcn_forward.1} parent=5 // pred_region
        // Predicated region
        $region65: #{simple_gcn_forward.1} parent=63 // pred_check
          %p405 = pneg %p136
        $region66: #{simple_gcn_forward.1} parent=63 // pred_check_branch
          %407 = sbr.rel (%p405) target = $region68
        $region67: #{simple_gcn_forward.1} parent=63 // pred_region
          %p408 = scmp.lt.s32.totalorder %s27, 2
          %s409 = scalar_select %p408, %s27, 2
          %s410 = scalar_lea.vmem %s4, %s409
        $region68: #{simple_gcn_forward.1} parent=63 // pred_fallthru
          _
      $region64: #{simple_gcn_forward.1} parent=5 // pred_fallthru
        _
      %p411 = scmp.le.s32.totalorder 1, %s20
      %p412 = scmp.lt.s32.totalorder %s20, 4
      %p413 = pnand %p411, %p412
      %p414 = pneg %p413
      // Predicated region
      $region69: #{simple_gcn_forward.1} parent=5 // pred_check
        _
      $region70: #{simple_gcn_forward.1} parent=5 // pred_check_branch
        %416 = sbr.rel (%p413) target = $region72
      $region71: #{simple_gcn_forward.1} parent=5 // pred_region
        %s417 = ssub.s32 %s20, 1
        %p418 = pneg %p53
        %p419 = pneg %p50
        %p420 = pneg %p74
        %p421 = pneg %p71
        %p422 = pneg %p95
        %p423 = pneg %p92
        %p424 = pneg %p116
        %p425 = pneg %p113
        %p426 = scmp.lt.s32.totalorder %s29, 2
        %s427 = scalar_select %p426, %s29, 2
        %s428 = scalar_lea.vmem %s4, %s427
        %p429 = pneg %p142
        %p430 = pneg %p139
        %p431 = scmp.lt.s32.totalorder %s30, 0
        %s432 = scalar_select %p431, %s30, 0
        %s433 = scalar_lea.vmem %s5, %s432
        %p434 = pneg %p168
        %p435 = pneg %p165
        %s436 = smul.u32 2, %s30
        %p437 = scmp.lt.s32.totalorder %s436, 1
        %s438 = scalar_select %p437, %s436, 1
        %s439 = smul.addr %s438, 4
        %s440 = scalar_lea.vmem %s6, %s439
        %p441 = pneg %p194
        %p442 = pneg %p191
        %p443 = pneg %p215
        %p444 = pneg %p212
        %p445 = pneg %p236
        %p446 = pneg %p233
        %p447 = pneg %p257
        %p448 = pneg %p254
        %p449 = pneg %p278
        %p450 = pneg %p275
        %p451 = pneg %p299
        %p452 = pneg %p296
        %p453 = pneg %p320
        %p454 = pneg %p317
        %p455 = pneg %p341
        %p456 = pneg %p338
        %p457 = scmp.lt.s32.totalorder %s29, 2
        %s458 = scalar_select %p457, %s29, 2
        %s459 = scalar_lea.vmem %s4, %s458
        %p460 = scmp.lt.s32.totalorder %s30, 0
        %s461 = scalar_select %p460, %s30, 0
        %s462 = scalar_lea.vmem %s5, %s461
        %s463 = smul.u32 2, %s30
        %p464 = scmp.lt.s32.totalorder %s463, 1
        %s465 = scalar_select %p464, %s463, 1
        %s466 = smul.addr %s465, 4
        %s467 = scalar_lea.vmem %s6, %s466
        %s468 = smul.u32 2, %s30
        %s470 = smul.u32 %s30, 16
        %s471 = sshra.s32 %s470, 3
        %s472 = sand.u32 %s470, 7
        %s473 = smul.addr %s471, 4
        %s474 = scalar_lea.vmem %s0, %s473
        %v475 = vld [vmem:[%s474] sm:$0xf]
        %v476 = vld [vmem:[%s474 + $0x4] sm:$0xf]
        %v477 = vld [vmem:[%s459] sm:$0x1]
        %p478 = scmp.eq.s32.totalorder %s29, 0
        // Predicated region
        $region73: #{simple_gcn_forward.1} parent=71 // pred_check
          %p479 = pneg %p478
        $region74: #{simple_gcn_forward.1} parent=71 // pred_check_branch
          %481 = sbr.rel (%p479) target = $region76
        $region75: #{simple_gcn_forward.1} parent=71 // pred_region
          %v482 = vld [vmem:[%s1] sm:$0xf]
          %v483 = vld [vmem:[%s1 + $0x4] sm:$0xf]
          %v485 = vlaneseq
          %v486 = vshrl.u32 %v485, 7
          %v487 = vsub.s32 0, %v486
          %v488 = vrot.slane %v477, %v487
          %v492 = vunpack.c.l.b16 %v475
          %v493 = vunpack.c.l.b16 %v476
          %v494 = vpack.c.b16 %v493, %v492
          %v497 = vunpack.c.l.b16 %v482
          %v498 = vunpack.c.l.b16 %v483
          %v499 = vpack.c.b16 %v498, %v497
          %vm501 = vcmask 130048
          %v503 = vsel %vm501, %v494, 0
          %505 = vmatprep.subr.bf16.mxu0 0
          %506 = vmatpush1.bf16.msra.mxu0 %v499
          %507 = vmatprep.subr.bf16.mxu0 0
          %508 = vmatpush1.bf16.msra.mxu0 0
          %509 = vmatprep.subr.bf16.mxu0 0
          %510 = vmatpush1.bf16.msra.mxu0 0
          %511 = vmatprep.subr.bf16.mxu0 0
          %512 = vmatpush1.bf16.msra.mxu0 0
          %513 = vmatprep.subr.bf16.mxu0 0
          %514 = vmatpush1.bf16.msra.mxu0 0
          %515 = vmatprep.subr.bf16.mxu0 0
          %516 = vmatpush1.bf16.msra.mxu0 0
          %517 = vmatprep.subr.bf16.mxu0 0
          %518 = vmatpush1.bf16.msra.mxu0 0
          %519 = vmatprep.subr.bf16.mxu0 0
          %520 = vmatpush1.bf16.msra.mxu0 0
          %521 = vmatprep.subr.bf16.mxu0 0
          %522 = vmatpush1.bf16.msra.mxu0 0
          %523 = vmatprep.subr.bf16.mxu0 0
          %524 = vmatpush1.bf16.msra.mxu0 0
          %525 = vmatprep.subr.bf16.mxu0 0
          %526 = vmatpush1.bf16.msra.mxu0 0
          %527 = vmatprep.subr.bf16.mxu0 0
          %528 = vmatpush1.bf16.msra.mxu0 0
          %529 = vmatprep.subr.bf16.mxu0 0
          %530 = vmatpush1.bf16.msra.mxu0 0
          %531 = vmatprep.subr.bf16.mxu0 0
          %532 = vmatpush1.bf16.msra.mxu0 0
          %533 = vmatprep.subr.bf16.mxu0 0
          %534 = vmatpush1.bf16.msra.mxu0 0
          %535 = vmatprep.subr.bf16.mxu0 0
          %536 = vmatpush1.bf16.msra.mxu0 0
          %537 = vmatprep.mubr.bf16.mxu0 0
          %538 = vmatmul.mubr.bf16.gmra.mrb[0].mxu0 %v503
          %v539 = vpop.f32.mrb[0].mxu0
          %v540 = vadd.f32 %v488, %v539
          %v541 = vpop.f32.mrb[0].mxu0
          %v542 = vpop.f32.mrb[0].mxu0
          %v543 = vadd.f32 %v488, %v542
          %v544 = vpop.f32.mrb[0].mxu0
          %545 = vdwg.mxu0
          %v546 = vmax.f32 %v540, 0.0
          %v547 = vmax.f32 %v543, 0.0
          %v548 = vpack.c.bf16 %v547, %v546
          %s549 = sshra.s32 %s470, 4
          %s550 = sand.u32 %s470, 15
          %s551 = smul.addr %s549, 8
          %s552 = scalar_lea.vmem [#allocation2], %s551
          %553 = vst [vmem:[%s552] sm:$0xff] %v548
        $region76: #{simple_gcn_forward.1} parent=71 // pred_fallthru
          _
        %p554 = scmp.eq.s32.totalorder %s29, 1
        // Predicated region
        $region77: #{simple_gcn_forward.1} parent=71 // pred_check
          %p555 = pneg %p554
        $region78: #{simple_gcn_forward.1} parent=71 // pred_check_branch
          %557 = sbr.rel (%p555) target = $region80
        $region79: #{simple_gcn_forward.1} parent=71 // pred_region
          %v558 = vld [vmem:[#allocation2] sm:$0xff]
          %v561 = vunpack.c.l.b16 %v475
          %v562 = vunpack.c.l.b16 %v476
          %v563 = vpack.c.b16 %v562, %v561
          %vm564 = vcmask 130048
          %v566 = vsel %vm564, %v563, 0
          %568 = vmatprep.subr.bf16.mxu0 0
          %569 = vmatpush1.bf16.msra.mxu0 %v558
          %570 = vmatprep.subr.bf16.mxu0 0
          %571 = vmatpush1.bf16.msra.mxu0 0
          %572 = vmatprep.subr.bf16.mxu0 0
          %573 = vmatpush1.bf16.msra.mxu0 0
          %574 = vmatprep.subr.bf16.mxu0 0
          %575 = vmatpush1.bf16.msra.mxu0 0
          %576 = vmatprep.subr.bf16.mxu0 0
          %577 = vmatpush1.bf16.msra.mxu0 0
          %578 = vmatprep.subr.bf16.mxu0 0
          %579 = vmatpush1.bf16.msra.mxu0 0
          %580 = vmatprep.subr.bf16.mxu0 0
          %581 = vmatpush1.bf16.msra.mxu0 0
          %582 = vmatprep.subr.bf16.mxu0 0
          %583 = vmatpush1.bf16.msra.mxu0 0
          %584 = vmatprep.subr.bf16.mxu0 0
          %585 = vmatpush1.bf16.msra.mxu0 0
          %586 = vmatprep.subr.bf16.mxu0 0
          %587 = vmatpush1.bf16.msra.mxu0 0
          %588 = vmatprep.subr.bf16.mxu0 0
          %589 = vmatpush1.bf16.msra.mxu0 0
          %590 = vmatprep.subr.bf16.mxu0 0
          %591 = vmatpush1.bf16.msra.mxu0 0
          %592 = vmatprep.subr.bf16.mxu0 0
          %593 = vmatpush1.bf16.msra.mxu0 0
          %594 = vmatprep.subr.bf16.mxu0 0
          %595 = vmatpush1.bf16.msra.mxu0 0
          %596 = vmatprep.subr.bf16.mxu0 0
          %597 = vmatpush1.bf16.msra.mxu0 0
          %598 = vmatprep.subr.bf16.mxu0 0
          %599 = vmatpush1.bf16.msra.mxu0 0
          %600 = vmatprep.mubr.bf16.mxu0 0
          %601 = vmatmul.mubr.bf16.gmra.mrb[0].mxu0 %v566
          %v602 = vpop.f32.mrb[0].mxu0
          %v603 = vadd.f32 0.0, %v602
          %v604 = vpop.f32.mrb[0].mxu0
          %v605 = vpop.f32.mrb[0].mxu0
          %v606 = vadd.f32 0.0, %v605
          %v607 = vpop.f32.mrb[0].mxu0
          %608 = vdwg.mxu0
          %v609 = vpack.c.bf16 %v606, %v603
          %v610 = vld [vmem:[%s2] sm:$0xf]
          %v611 = vld [vmem:[%s2 + $0x4] sm:$0xf]
          %v612 = vld [vmem:[%s2 + $0x8] sm:$0xf]
          %v613 = vld [vmem:[%s2 + $0xc] sm:$0xf]
          %v614 = vld [vmem:[%s2 + $0x10] sm:$0xf]
          %v615 = vld [vmem:[%s2 + $0x14] sm:$0xf]
          %v616 = vld [vmem:[%s2 + $0x18] sm:$0xf]
          %v617 = vld [vmem:[%s2 + $0x1c] sm:$0xf]
          %v618 = vld [vmem:[%s2 + $0x20] sm:$0xf]
          %v619 = vld [vmem:[%s2 + $0x24] sm:$0xf]
          %v620 = vld [vmem:[%s2 + $0x28] sm:$0xf]
          %v621 = vld [vmem:[%s2 + $0x2c] sm:$0xf]
          %v622 = vld [vmem:[%s2 + $0x30] sm:$0xf]
          %v623 = vld [vmem:[%s2 + $0x34] sm:$0xf]
          %v624 = vld [vmem:[%s2 + $0x38] sm:$0xf]
          %v625 = vld [vmem:[%s2 + $0x3c] sm:$0xf]
          %v627 = vlaneseq
          %v628 = vshrl.u32 %v627, 7
          %v629 = vsub.s32 0, %v628
          %v630 = vrot.slane %v477, %v629
          %v648 = vunpack.c.l.b16 %v610
          %v649 = vunpack.c.l.b16 %v611
          %v650 = vunpack.c.l.b16 %v612
          %v651 = vunpack.c.l.b16 %v613
          %v652 = vunpack.c.l.b16 %v614
          %v653 = vunpack.c.l.b16 %v615
          %v654 = vunpack.c.l.b16 %v616
          %v655 = vunpack.c.l.b16 %v617
          %v656 = vunpack.c.l.b16 %v618
          %v657 = vunpack.c.l.b16 %v619
          %v658 = vunpack.c.l.b16 %v620
          %v659 = vunpack.c.l.b16 %v621
          %v660 = vunpack.c.l.b16 %v622
          %v661 = vunpack.c.l.b16 %v623
          %v662 = vunpack.c.l.b16 %v624
          %v663 = vunpack.c.l.b16 %v625
          %v664 = vpack.c.b16 %v649, %v648
          %v665 = vpack.c.b16 %v651, %v650
          %v666 = vpack.c.b16 %v653, %v652
          %v667 = vpack.c.b16 %v655, %v654
          %v668 = vpack.c.b16 %v657, %v656
          %v669 = vpack.c.b16 %v659, %v658
          %v670 = vpack.c.b16 %v661, %v660
          %v671 = vpack.c.b16 %v663, %v662
          %680 = vmatprep.subr.bf16.mxu0 0
          %681 = vmatpush1.bf16.msra.mxu0 %v664
          %682 = vmatprep.subr.bf16.mxu0 0
          %683 = vmatpush1.bf16.msra.mxu0 %v665
          %684 = vmatprep.subr.bf16.mxu0 0
          %685 = vmatpush1.bf16.msra.mxu0 %v666
          %686 = vmatprep.subr.bf16.mxu0 0
          %687 = vmatpush1.bf16.msra.mxu0 %v667
          %688 = vmatprep.subr.bf16.mxu0 0
          %689 = vmatpush1.bf16.msra.mxu0 %v668
          %690 = vmatprep.subr.bf16.mxu0 0
          %691 = vmatpush1.bf16.msra.mxu0 %v669
          %692 = vmatprep.subr.bf16.mxu0 0
          %693 = vmatpush1.bf16.msra.mxu0 %v670
          %694 = vmatprep.subr.bf16.mxu0 0
          %695 = vmatpush1.bf16.msra.mxu0 %v671
          %696 = vmatprep.subr.bf16.mxu0 0
          %697 = vmatpush1.bf16.msra.mxu0 0
          %698 = vmatprep.subr.bf16.mxu0 0
          %699 = vmatpush1.bf16.msra.mxu0 0
          %700 = vmatprep.subr.bf16.mxu0 0
          %701 = vmatpush1.bf16.msra.mxu0 0
          %702 = vmatprep.subr.bf16.mxu0 0
          %703 = vmatpush1.bf16.msra.mxu0 0
          %704 = vmatprep.subr.bf16.mxu0 0
          %705 = vmatpush1.bf16.msra.mxu0 0
          %706 = vmatprep.subr.bf16.mxu0 0
          %707 = vmatpush1.bf16.msra.mxu0 0
          %708 = vmatprep.subr.bf16.mxu0 0
          %709 = vmatpush1.bf16.msra.mxu0 0
          %710 = vmatprep.subr.bf16.mxu0 0
          %711 = vmatpush1.bf16.msra.mxu0 0
          %712 = vmatprep.mubr.bf16.mxu0 0
          %713 = vmatmul.mubr.bf16.gmra.mrb[0].mxu0 %v609
          %v714 = vpop.f32.mrb[0].mxu0
          %v715 = vadd.f32 %v630, %v714
          %v716 = vpop.f32.mrb[0].mxu0
          %v717 = vpop.f32.mrb[0].mxu0
          %v718 = vadd.f32 %v630, %v717
          %v719 = vpop.f32.mrb[0].mxu0
          %720 = vdwg.mxu0
          %v721 = vmax.f32 %v715, 0.0
          %v722 = vmax.f32 %v718, 0.0
          %v723 = vpack.c.bf16 %v722, %v721
          %s724 = sshra.s32 %s470, 4
          %s725 = sand.u32 %s470, 15
          %s726 = smul.addr %s724, 8
          %s727 = scalar_lea.vmem [#allocation3], %s726
          %728 = vst [vmem:[%s727] sm:$0xff] %v723
        $region80: #{simple_gcn_forward.1} parent=71 // pred_fallthru
          _
        %p729 = scmp.eq.s32.totalorder %s29, 2
        // Predicated region
        $region81: #{simple_gcn_forward.1} parent=71 // pred_check
          %p730 = pneg %p729
        $region82: #{simple_gcn_forward.1} parent=71 // pred_check_branch
          %732 = sbr.rel (%p730) target = $region84
        $region83: #{simple_gcn_forward.1} parent=71 // pred_region
          %v733 = vld [vmem:[#allocation3] sm:$0xff]
          %v736 = vunpack.c.l.b16 %v475
          %v737 = vunpack.c.l.b16 %v476
          %v738 = vpack.c.b16 %v737, %v736
          %vm739 = vcmask 130048
          %v741 = vsel %vm739, %v738, 0
          %743 = vmatprep.subr.bf16.mxu0 0
          %744 = vmatpush1.bf16.msra.mxu0 %v733
          %745 = vmatprep.subr.bf16.mxu0 0
          %746 = vmatpush1.bf16.msra.mxu0 0
          %747 = vmatprep.subr.bf16.mxu0 0
          %748 = vmatpush1.bf16.msra.mxu0 0
          %749 = vmatprep.subr.bf16.mxu0 0
          %750 = vmatpush1.bf16.msra.mxu0 0
          %751 = vmatprep.subr.bf16.mxu0 0
          %752 = vmatpush1.bf16.msra.mxu0 0
          %753 = vmatprep.subr.bf16.mxu0 0
          %754 = vmatpush1.bf16.msra.mxu0 0
          %755 = vmatprep.subr.bf16.mxu0 0
          %756 = vmatpush1.bf16.msra.mxu0 0
          %757 = vmatprep.subr.bf16.mxu0 0
          %758 = vmatpush1.bf16.msra.mxu0 0
          %759 = vmatprep.subr.bf16.mxu0 0
          %760 = vmatpush1.bf16.msra.mxu0 0
          %761 = vmatprep.subr.bf16.mxu0 0
          %762 = vmatpush1.bf16.msra.mxu0 0
          %763 = vmatprep.subr.bf16.mxu0 0
          %764 = vmatpush1.bf16.msra.mxu0 0
          %765 = vmatprep.subr.bf16.mxu0 0
          %766 = vmatpush1.bf16.msra.mxu0 0
          %767 = vmatprep.subr.bf16.mxu0 0
          %768 = vmatpush1.bf16.msra.mxu0 0
          %769 = vmatprep.subr.bf16.mxu0 0
          %770 = vmatpush1.bf16.msra.mxu0 0
          %771 = vmatprep.subr.bf16.mxu0 0
          %772 = vmatpush1.bf16.msra.mxu0 0
          %773 = vmatprep.subr.bf16.mxu0 0
          %774 = vmatpush1.bf16.msra.mxu0 0
          %775 = vmatprep.mubr.bf16.mxu0 0
          %776 = vmatmul.mubr.bf16.gmra.mrb[0].mxu0 %v741
          %v777 = vpop.f32.mrb[0].mxu0
          %v778 = vadd.f32 0.0, %v777
          %v779 = vpop.f32.mrb[0].mxu0
          %v780 = vpop.f32.mrb[0].mxu0
          %v781 = vadd.f32 0.0, %v780
          %v782 = vpop.f32.mrb[0].mxu0
          %783 = vdwg.mxu0
          %v784 = vpack.c.bf16 %v781, %v778
          %v785 = vld [vmem:[%s3] sm:$0xf]
          %v786 = vld [vmem:[%s3 + $0x4] sm:$0xf]
          %v787 = vld [vmem:[%s3 + $0x8] sm:$0xf]
          %v788 = vld [vmem:[%s3 + $0xc] sm:$0xf]
          %v789 = vld [vmem:[%s3 + $0x10] sm:$0xf]
          %v790 = vld [vmem:[%s3 + $0x14] sm:$0xf]
          %v791 = vld [vmem:[%s3 + $0x18] sm:$0xf]
          %v792 = vld [vmem:[%s3 + $0x1c] sm:$0xf]
          %v793 = vld [vmem:[%s3 + $0x20] sm:$0xf]
          %v794 = vld [vmem:[%s3 + $0x24] sm:$0xf]
          %v795 = vld [vmem:[%s3 + $0x28] sm:$0xf]
          %v796 = vld [vmem:[%s3 + $0x2c] sm:$0xf]
          %v797 = vld [vmem:[%s3 + $0x30] sm:$0xf]
          %v798 = vld [vmem:[%s3 + $0x34] sm:$0xf]
          %v799 = vld [vmem:[%s3 + $0x38] sm:$0xf]
          %v800 = vld [vmem:[%s3 + $0x3c] sm:$0xf]
          %v802 = vlaneseq
          %v803 = vshrl.u32 %v802, 7
          %v804 = vsub.s32 0, %v803
          %v805 = vrot.slane %v477, %v804
          %v823 = vunpack.c.l.b16 %v785
          %v824 = vunpack.c.l.b16 %v786
          %v825 = vunpack.c.l.b16 %v787
          %v826 = vunpack.c.l.b16 %v788
          %v827 = vunpack.c.l.b16 %v789
          %v828 = vunpack.c.l.b16 %v790
          %v829 = vunpack.c.l.b16 %v791
          %v830 = vunpack.c.l.b16 %v792
          %v831 = vunpack.c.l.b16 %v793
          %v832 = vunpack.c.l.b16 %v794
          %v833 = vunpack.c.l.b16 %v795
          %v834 = vunpack.c.l.b16 %v796
          %v835 = vunpack.c.l.b16 %v797
          %v836 = vunpack.c.l.b16 %v798
          %v837 = vunpack.c.l.b16 %v799
          %v838 = vunpack.c.l.b16 %v800
          %v839 = vpack.c.b16 %v824, %v823
          %v840 = vpack.c.b16 %v826, %v825
          %v841 = vpack.c.b16 %v828, %v827
          %v842 = vpack.c.b16 %v830, %v829
          %v843 = vpack.c.b16 %v832, %v831
          %v844 = vpack.c.b16 %v834, %v833
          %v845 = vpack.c.b16 %v836, %v835
          %v846 = vpack.c.b16 %v838, %v837
          %855 = vmatprep.subr.bf16.mxu0 0
          %856 = vmatpush1.bf16.msra.mxu0 %v839
          %857 = vmatprep.subr.bf16.mxu0 0
          %858 = vmatpush1.bf16.msra.mxu0 %v840
          %859 = vmatprep.subr.bf16.mxu0 0
          %860 = vmatpush1.bf16.msra.mxu0 %v841
          %861 = vmatprep.subr.bf16.mxu0 0
          %862 = vmatpush1.bf16.msra.mxu0 %v842
          %863 = vmatprep.subr.bf16.mxu0 0
          %864 = vmatpush1.bf16.msra.mxu0 %v843
          %865 = vmatprep.subr.bf16.mxu0 0
          %866 = vmatpush1.bf16.msra.mxu0 %v844
          %867 = vmatprep.subr.bf16.mxu0 0
          %868 = vmatpush1.bf16.msra.mxu0 %v845
          %869 = vmatprep.subr.bf16.mxu0 0
          %870 = vmatpush1.bf16.msra.mxu0 %v846
          %871 = vmatprep.subr.bf16.mxu0 0
          %872 = vmatpush1.bf16.msra.mxu0 0
          %873 = vmatprep.subr.bf16.mxu0 0
          %874 = vmatpush1.bf16.msra.mxu0 0
          %875 = vmatprep.subr.bf16.mxu0 0
          %876 = vmatpush1.bf16.msra.mxu0 0
          %877 = vmatprep.subr.bf16.mxu0 0
          %878 = vmatpush1.bf16.msra.mxu0 0
          %879 = vmatprep.subr.bf16.mxu0 0
          %880 = vmatpush1.bf16.msra.mxu0 0
          %881 = vmatprep.subr.bf16.mxu0 0
          %882 = vmatpush1.bf16.msra.mxu0 0
          %883 = vmatprep.subr.bf16.mxu0 0
          %884 = vmatpush1.bf16.msra.mxu0 0
          %885 = vmatprep.subr.bf16.mxu0 0
          %886 = vmatpush1.bf16.msra.mxu0 0
          %887 = vmatprep.mubr.bf16.mxu0 0
          %888 = vmatmul.mubr.bf16.gmra.mrb[0].mxu0 %v784
          %v889 = vpop.f32.mrb[0].mxu0
          %v890 = vadd.f32 %v805, %v889
          %v891 = vpop.f32.mrb[0].mxu0
          %v892 = vpop.f32.mrb[0].mxu0
          %v893 = vadd.f32 %v805, %v892
          %v894 = vpop.f32.mrb[0].mxu0
          %895 = vdwg.mxu0
          %v896 = vmax.f32 %v890, 0.0
          %v897 = vmax.f32 %v893, 0.0
          %p898 = scmp.eq.s32.totalorder %s30, 0
          // Predicated region
          $region85: #{simple_gcn_forward.1} parent=83 // pred_check
            %p899 = pneg %p898
          $region86: #{simple_gcn_forward.1} parent=83 // pred_check_branch
            %901 = sbr.rel (%p899) target = $region88
          $region87: #{simple_gcn_forward.1} parent=83 // pred_region
            %902 = vst [vmem:[#allocation4] sm:$0x3] 0.0
            %903 = vst [vmem:[#allocation5] sm:$0x3] 0.0
          $region88: #{simple_gcn_forward.1} parent=83 // pred_fallthru
            _
          %v904 = vld [vmem:[#allocation4] sm:$0x3]
          %v905 = vld [vmem:[%s462] sm:$0x1]
          %v906 = vpack.c.bf16 %v897, %v896
          %v908 = vsel %vm739, %v905, 0
          %910 = vmatprep.subr.bf16.mxu0 0
          %911 = vmatpush1.bf16.msra.mxu0 %v906
          %912 = vmatprep.subr.bf16.mxu0 0
          %913 = vmatpush1.bf16.msra.mxu0 0
          %914 = vmatprep.subr.bf16.mxu0 0
          %915 = vmatpush1.bf16.msra.mxu0 0
          %916 = vmatprep.subr.bf16.mxu0 0
          %917 = vmatpush1.bf16.msra.mxu0 0
          %918 = vmatprep.subr.bf16.mxu0 0
          %919 = vmatpush1.bf16.msra.mxu0 0
          %920 = vmatprep.subr.bf16.mxu0 0
          %921 = vmatpush1.bf16.msra.mxu0 0
          %922 = vmatprep.subr.bf16.mxu0 0
          %923 = vmatpush1.bf16.msra.mxu0 0
          %924 = vmatprep.subr.bf16.mxu0 0
          %925 = vmatpush1.bf16.msra.mxu0 0
          %926 = vmatprep.subr.bf16.mxu0 0
          %927 = vmatpush1.bf16.msra.mxu0 0
          %928 = vmatprep.subr.bf16.mxu0 0
          %929 = vmatpush1.bf16.msra.mxu0 0
          %930 = vmatprep.subr.bf16.mxu0 0
          %931 = vmatpush1.bf16.msra.mxu0 0
          %932 = vmatprep.subr.bf16.mxu0 0
          %933 = vmatpush1.bf16.msra.mxu0 0
          %934 = vmatprep.subr.bf16.mxu0 0
          %935 = vmatpush1.bf16.msra.mxu0 0
          %936 = vmatprep.subr.bf16.mxu0 0
          %937 = vmatpush1.bf16.msra.mxu0 0
          %938 = vmatprep.subr.bf16.mxu0 0
          %939 = vmatpush1.bf16.msra.mxu0 0
          %940 = vmatprep.subr.bf16.mxu0 0
          %941 = vmatpush1.bf16.msra.mxu0 0
          %942 = vmatprep.mubr.bf16.mxu0 0
          %943 = vmatmul.mubr.bf16.gmra.mrb[0].mxu0 %v908
          %v944 = vpop.f32.mrb[0].mxu0
          %v945 = vadd.f32 0.0, %v944
          %v946 = vpop.f32.mrb[0].mxu0
          %v947 = vpop.f32.mrb[0].mxu0
          %v948 = vpop.f32.mrb[0].mxu0
          %949 = vdwg.mxu0
          %v950 = vadd.f32 %v904, %v945
          %951 = vst [vmem:[#allocation4] sm:$0x3] %v950
          %v952 = vld [vmem:[%s467] sm:$0xf]
          %v953 = vld [vmem:[%s467 + $0x4] sm:$0xf]
          %v954 = vunpack.c.l.bf16 %v952
          %v955 = vunpack.c.l.bf16 %v953
          %957 = vset.pattern.permute.xlu0 0
          %958 = vperm.xlu0 %957, %v954
          %v959 = vpop.permute.xlu0 %958
          %962 = vset.pattern.permute.xlu0 0
          %963 = vperm.xlu0 %962, %v955
          %v964 = vpop.permute.xlu0 %963
          %v966 = vmul.f32 %v896, %v959
          %v967 = vmul.f32 %v897, %v964
          %v968 = vmax.f32 %v966, %v967
          %v969 = vrot.slane %v968, 4
          %v970 = vmax.f32 %v968, %v969
          %v971 = vrot.slane %v970, 2
          %v972 = vmax.f32 %v970, %v971
          %v973 = vrot.slane %v972, 1
          %v974 = vmax.f32 %v972, %v973
          %975 = vset.pattern.permute.xlu0 1
          %976 = vperm.xlu0 %975, %v954
          %v977 = vpop.permute.xlu0 %976
          %979 = vset.pattern.permute.xlu0 1
          %980 = vperm.xlu0 %979, %v955
          %v981 = vpop.permute.xlu0 %980
          %v983 = vmul.f32 %v896, %v977
          %v984 = vmul.f32 %v897, %v981
          %v985 = vmax.f32 %v983, %v984
          %v986 = vrot.slane %v985, 4
          %v987 = vmax.f32 %v985, %v986
          %v988 = vrot.slane %v987, 2
          %v989 = vmax.f32 %v987, %v988
          %v990 = vrot.slane %v989, 1
          %v991 = vmax.f32 %v989, %v990
          %v992 = vld [vmem:[#allocation5] sm:$0x3]
          %vm993 = vcmask 1040384
          %v994 = vsel %vm993, %v974, %v991
          %v995 = vmax.f32 %v992, %v994
          %996 = vst [vmem:[#allocation5] sm:$0x3] %v995
          // Predicated region
          $region89: #{simple_gcn_forward.1} parent=83 // pred_check
            %p997 = pneg %p898
          $region90: #{simple_gcn_forward.1} parent=83 // pred_check_branch
            %999 = sbr.rel (%p997) target = $region92
          $region91: #{simple_gcn_forward.1} parent=83 // pred_region
            %v1000 = vld [vmem:[#allocation4] sm:$0x3]
            %v1001 = vld [vmem:[%s7] sm:$0x3]
            %1003 = vset.pattern.permute.xlu0 0
            %1004 = vperm.xlu0 %1003, %v1001
            %v1005 = vpop.permute.xlu0 %1004
            %v1007 = vmul.f32 %v1000, %v1005
            %v1008 = vpack.c.bf16 %v1007, %v1007
            %v1009 = vld [vmem:[#allocation5] sm:$0x3]
            %v1010 = vpack.c.bf16 %v1009, %v1009
            %v1011 = vld [vmem:[%s8] sm:$0xf]
            %v1012 = vld [vmem:[%s8 + $0x4] sm:$0xf]
            %v1013 = vld [vmem:[%s8 + $0x8] sm:$0xf]
            %v1014 = vld [vmem:[%s8 + $0xc] sm:$0xf]
            %v1015 = vld [vmem:[%s8 + $0x10] sm:$0xf]
            %v1016 = vld [vmem:[%s8 + $0x14] sm:$0xf]
            %v1017 = vld [vmem:[%s8 + $0x18] sm:$0xf]
            %v1018 = vld [vmem:[%s8 + $0x1c] sm:$0xf]
            %v1019 = vld [vmem:[%s8 + $0x20] sm:$0xf]
            %v1020 = vld [vmem:[%s8 + $0x24] sm:$0xf]
            %v1021 = vld [vmem:[%s8 + $0x28] sm:$0xf]
            %v1022 = vld [vmem:[%s8 + $0x2c] sm:$0xf]
            %v1023 = vld [vmem:[%s8 + $0x30] sm:$0xf]
            %v1024 = vld [vmem:[%s8 + $0x34] sm:$0xf]
            %v1025 = vld [vmem:[%s8 + $0x38] sm:$0xf]
            %v1026 = vld [vmem:[%s8 + $0x3c] sm:$0xf]
            %v1027 = vld [vmem:[%s9] sm:$0xf]
            %v1028 = vld [vmem:[%s9 + $0x4] sm:$0xf]
            %v1029 = vld [vmem:[%s9 + $0x8] sm:$0xf]
            %v1030 = vld [vmem:[%s9 + $0xc] sm:$0xf]
            %v1031 = vld [vmem:[%s9 + $0x10] sm:$0xf]
            %v1032 = vld [vmem:[%s9 + $0x14] sm:$0xf]
            %v1033 = vld [vmem:[%s9 + $0x18] sm:$0xf]
            %v1034 = vld [vmem:[%s9 + $0x1c] sm:$0xf]
            %v1035 = vld [vmem:[%s9 + $0x20] sm:$0xf]
            %v1036 = vld [vmem:[%s9 + $0x24] sm:$0xf]
            %v1037 = vld [vmem:[%s9 + $0x28] sm:$0xf]
            %v1038 = vld [vmem:[%s9 + $0x2c] sm:$0xf]
            %v1039 = vld [vmem:[%s9 + $0x30] sm:$0xf]
            %v1040 = vld [vmem:[%s9 + $0x34] sm:$0xf]
            %v1041 = vld [vmem:[%s9 + $0x38] sm:$0xf]
            %v1042 = vld [vmem:[%s9 + $0x3c] sm:$0xf]
            %v1059 = vunpack.c.l.b16 %v1027
            %v1060 = vunpack.c.l.b16 %v1028
            %v1061 = vunpack.c.l.b16 %v1029
            %v1062 = vunpack.c.l.b16 %v1030
            %v1063 = vunpack.c.l.b16 %v1031
            %v1064 = vunpack.c.l.b16 %v1032
            %v1065 = vunpack.c.l.b16 %v1033
            %v1066 = vunpack.c.l.b16 %v1034
            %v1067 = vunpack.c.l.b16 %v1035
            %v1068 = vunpack.c.l.b16 %v1036
            %v1069 = vunpack.c.l.b16 %v1037
            %v1070 = vunpack.c.l.b16 %v1038
            %v1071 = vunpack.c.l.b16 %v1039
            %v1072 = vunpack.c.l.b16 %v1040
            %v1073 = vunpack.c.l.b16 %v1041
            %v1074 = vunpack.c.l.b16 %v1042
            %v1075 = vpack.c.b16 %v1060, %v1059
            %v1076 = vpack.c.b16 %v1062, %v1061
            %v1077 = vpack.c.b16 %v1064, %v1063
            %v1078 = vpack.c.b16 %v1066, %v1065
            %v1079 = vpack.c.b16 %v1068, %v1067
            %v1080 = vpack.c.b16 %v1070, %v1069
            %v1081 = vpack.c.b16 %v1072, %v1071
            %v1082 = vpack.c.b16 %v1074, %v1073
            %1091 = vmatprep.subr.bf16.mxu0 0
            %1092 = vmatpush1.bf16.msra.mxu0 %v1075
            %1093 = vmatprep.subr.bf16.mxu0 0
            %1094 = vmatpush1.bf16.msra.mxu0 %v1076
            %1095 = vmatprep.subr.bf16.mxu0 0
            %1096 = vmatpush1.bf16.msra.mxu0 %v1077
            %1097 = vmatprep.subr.bf16.mxu0 0
            %1098 = vmatpush1.bf16.msra.mxu0 %v1078
            %1099 = vmatprep.subr.bf16.mxu0 0
            %1100 = vmatpush1.bf16.msra.mxu0 %v1079
            %1101 = vmatprep.subr.bf16.mxu0 0
            %1102 = vmatpush1.bf16.msra.mxu0 %v1080
            %1103 = vmatprep.subr.bf16.mxu0 0
            %1104 = vmatpush1.bf16.msra.mxu0 %v1081
            %1105 = vmatprep.subr.bf16.mxu0 0
            %1106 = vmatpush1.bf16.msra.mxu0 %v1082
            %1107 = vmatprep.subr.bf16.mxu0 0
            %1108 = vmatpush1.bf16.msra.mxu0 0
            %1109 = vmatprep.subr.bf16.mxu0 0
            %1110 = vmatpush1.bf16.msra.mxu0 0
            %1111 = vmatprep.subr.bf16.mxu0 0
            %1112 = vmatpush1.bf16.msra.mxu0 0
            %1113 = vmatprep.subr.bf16.mxu0 0
            %1114 = vmatpush1.bf16.msra.mxu0 0
            %1115 = vmatprep.subr.bf16.mxu0 0
            %1116 = vmatpush1.bf16.msra.mxu0 0
            %1117 = vmatprep.subr.bf16.mxu0 0
            %1118 = vmatpush1.bf16.msra.mxu0 0
            %1119 = vmatprep.subr.bf16.mxu0 0
            %1120 = vmatpush1.bf16.msra.mxu0 0
            %1121 = vmatprep.subr.bf16.mxu0 0
            %1122 = vmatpush1.bf16.msra.mxu0 0
            %1123 = vmatprep.mubr.bf16.mxu0 0
            %1124 = vmatmul.mubr.bf16.gmra.mrb[0].mxu0 %v1010
            %v1125 = vpop.f32.mrb[0].mxu0
            %v1126 = vadd.f32 0.0, %v1125
            %v1127 = vpop.f32.mrb[0].mxu0
            %v1128 = vpop.f32.mrb[0].mxu0
            %v1129 = vpop.f32.mrb[0].mxu0
            %1130 = vdwg.mxu0
            %v1147 = vunpack.c.l.b16 %v1011
            %v1148 = vunpack.c.l.b16 %v1012
            %v1149 = vunpack.c.l.b16 %v1013
            %v1150 = vunpack.c.l.b16 %v1014
            %v1151 = vunpack.c.l.b16 %v1015
            %v1152 = vunpack.c.l.b16 %v1016
            %v1153 = vunpack.c.l.b16 %v1017
            %v1154 = vunpack.c.l.b16 %v1018
            %v1155 = vunpack.c.l.b16 %v1019
            %v1156 = vunpack.c.l.b16 %v1020
            %v1157 = vunpack.c.l.b16 %v1021
            %v1158 = vunpack.c.l.b16 %v1022
            %v1159 = vunpack.c.l.b16 %v1023
            %v1160 = vunpack.c.l.b16 %v1024
            %v1161 = vunpack.c.l.b16 %v1025
            %v1162 = vunpack.c.l.b16 %v1026
            %v1163 = vpack.c.b16 %v1148, %v1147
            %v1164 = vpack.c.b16 %v1150, %v1149
            %v1165 = vpack.c.b16 %v1152, %v1151
            %v1166 = vpack.c.b16 %v1154, %v1153
            %v1167 = vpack.c.b16 %v1156, %v1155
            %v1168 = vpack.c.b16 %v1158, %v1157
            %v1169 = vpack.c.b16 %v1160, %v1159
            %v1170 = vpack.c.b16 %v1162, %v1161
            %1179 = vmatprep.subr.bf16.mxu0 0
            %1180 = vmatpush1.bf16.msra.mxu0 %v1163
            %1181 = vmatprep.subr.bf16.mxu0 0
            %1182 = vmatpush1.bf16.msra.mxu0 %v1164
            %1183 = vmatprep.subr.bf16.mxu0 0
            %1184 = vmatpush1.bf16.msra.mxu0 %v1165
            %1185 = vmatprep.subr.bf16.mxu0 0
            %1186 = vmatpush1.bf16.msra.mxu0 %v1166
            %1187 = vmatprep.subr.bf16.mxu0 0
            %1188 = vmatpush1.bf16.msra.mxu0 %v1167
            %1189 = vmatprep.subr.bf16.mxu0 0
            %1190 = vmatpush1.bf16.msra.mxu0 %v1168
            %1191 = vmatprep.subr.bf16.mxu0 0
            %1192 = vmatpush1.bf16.msra.mxu0 %v1169
            %1193 = vmatprep.subr.bf16.mxu0 0
            %1194 = vmatpush1.bf16.msra.mxu0 %v1170
            %1195 = vmatprep.subr.bf16.mxu0 0
            %1196 = vmatpush1.bf16.msra.mxu0 0
            %1197 = vmatprep.subr.bf16.mxu0 0
            %1198 = vmatpush1.bf16.msra.mxu0 0
            %1199 = vmatprep.subr.bf16.mxu0 0
            %1200 = vmatpush1.bf16.msra.mxu0 0
            %1201 = vmatprep.subr.bf16.mxu0 0
            %1202 = vmatpush1.bf16.msra.mxu0 0
            %1203 = vmatprep.subr.bf16.mxu0 0
            %1204 = vmatpush1.bf16.msra.mxu0 0
            %1205 = vmatprep.subr.bf16.mxu0 0
            %1206 = vmatpush1.bf16.msra.mxu0 0
            %1207 = vmatprep.subr.bf16.mxu0 0
            %1208 = vmatpush1.bf16.msra.mxu0 0
            %1209 = vmatprep.subr.bf16.mxu0 0
            %1210 = vmatpush1.bf16.msra.mxu0 0
            %1211 = vmatprep.mubr.bf16.mxu0 0
            %1212 = vmatmul.mubr.bf16.gmra.mrb[0].mxu0 %v1008
            %v1213 = vpop.f32.mrb[0].mxu0
            %v1214 = vadd.f32 %v1126, %v1213
            %v1215 = vpop.f32.mrb[0].mxu0
            %v1216 = vpop.f32.mrb[0].mxu0
            %v1217 = vpop.f32.mrb[0].mxu0
            %1218 = vdwg.mxu0
            %v1219 = vld [vmem:[%s10] sm:$0x1]
            %v1221 = vlaneseq
            %v1222 = vshrl.u32 %v1221, 7
            %v1223 = vsub.s32 0, %v1222
            %v1224 = vrot.slane %v1219, %v1223
            %v1226 = vadd.f32 %v1214, %v1224
            %v1227 = vmax.f32 %v1226, 0.0
            %v1228 = vpack.c.bf16 %v1227, %v1227
            %v1229 = vld [vmem:[%s11] sm:$0xf]
            %v1230 = vld [vmem:[%s11 + $0x4] sm:$0xf]
            %v1231 = vld [vmem:[%s11 + $0x8] sm:$0xf]
            %v1232 = vld [vmem:[%s11 + $0xc] sm:$0xf]
            %v1233 = vld [vmem:[%s11 + $0x10] sm:$0xf]
            %v1234 = vld [vmem:[%s11 + $0x14] sm:$0xf]
            %v1235 = vld [vmem:[%s11 + $0x18] sm:$0xf]
            %v1236 = vld [vmem:[%s11 + $0x1c] sm:$0xf]
            %v1237 = vld [vmem:[%s11 + $0x20] sm:$0xf]
            %v1238 = vld [vmem:[%s11 + $0x24] sm:$0xf]
            %v1239 = vld [vmem:[%s11 + $0x28] sm:$0xf]
            %v1240 = vld [vmem:[%s11 + $0x2c] sm:$0xf]
            %v1241 = vld [vmem:[%s11 + $0x30] sm:$0xf]
            %v1242 = vld [vmem:[%s11 + $0x34] sm:$0xf]
            %v1243 = vld [vmem:[%s11 + $0x38] sm:$0xf]
            %v1244 = vld [vmem:[%s11 + $0x3c] sm:$0xf]
            %v1245 = vld [vmem:[%s12] sm:$0x1]
            %v1247 = vlaneseq
            %v1248 = vshrl.u32 %v1247, 7
            %v1249 = vsub.s32 0, %v1248
            %v1250 = vrot.slane %v1245, %v1249
            %v1268 = vunpack.c.l.b16 %v1229
            %v1269 = vunpack.c.l.b16 %v1230
            %v1270 = vunpack.c.l.b16 %v1231
            %v1271 = vunpack.c.l.b16 %v1232
            %v1272 = vunpack.c.l.b16 %v1233
            %v1273 = vunpack.c.l.b16 %v1234
            %v1274 = vunpack.c.l.b16 %v1235
            %v1275 = vunpack.c.l.b16 %v1236
            %v1276 = vunpack.c.l.b16 %v1237
            %v1277 = vunpack.c.l.b16 %v1238
            %v1278 = vunpack.c.l.b16 %v1239
            %v1279 = vunpack.c.l.b16 %v1240
            %v1280 = vunpack.c.l.b16 %v1241
            %v1281 = vunpack.c.l.b16 %v1242
            %v1282 = vunpack.c.l.b16 %v1243
            %v1283 = vunpack.c.l.b16 %v1244
            %v1284 = vpack.c.b16 %v1269, %v1268
            %v1285 = vpack.c.b16 %v1271, %v1270
            %v1286 = vpack.c.b16 %v1273, %v1272
            %v1287 = vpack.c.b16 %v1275, %v1274
            %v1288 = vpack.c.b16 %v1277, %v1276
            %v1289 = vpack.c.b16 %v1279, %v1278
            %v1290 = vpack.c.b16 %v1281, %v1280
            %v1291 = vpack.c.b16 %v1283, %v1282
            %1300 = vmatprep.subr.bf16.mxu0 0
            %1301 = vmatpush1.bf16.msra.mxu0 %v1284
            %1302 = vmatprep.subr.bf16.mxu0 0
            %1303 = vmatpush1.bf16.msra.mxu0 %v1285
            %1304 = vmatprep.subr.bf16.mxu0 0
            %1305 = vmatpush1.bf16.msra.mxu0 %v1286
            %1306 = vmatprep.subr.bf16.mxu0 0
            %1307 = vmatpush1.bf16.msra.mxu0 %v1287
            %1308 = vmatprep.subr.bf16.mxu0 0
            %1309 = vmatpush1.bf16.msra.mxu0 %v1288
            %1310 = vmatprep.subr.bf16.mxu0 0
            %1311 = vmatpush1.bf16.msra.mxu0 %v1289
            %1312 = vmatprep.subr.bf16.mxu0 0
            %1313 = vmatpush1.bf16.msra.mxu0 %v1290
            %1314 = vmatprep.subr.bf16.mxu0 0
            %1315 = vmatpush1.bf16.msra.mxu0 %v1291
            %1316 = vmatprep.subr.bf16.mxu0 0
            %1317 = vmatpush1.bf16.msra.mxu0 0
            %1318 = vmatprep.subr.bf16.mxu0 0
            %1319 = vmatpush1.bf16.msra.mxu0 0
            %1320 = vmatprep.subr.bf16.mxu0 0
            %1321 = vmatpush1.bf16.msra.mxu0 0
            %1322 = vmatprep.subr.bf16.mxu0 0
            %1323 = vmatpush1.bf16.msra.mxu0 0
            %1324 = vmatprep.subr.bf16.mxu0 0
            %1325 = vmatpush1.bf16.msra.mxu0 0
            %1326 = vmatprep.subr.bf16.mxu0 0
            %1327 = vmatpush1.bf16.msra.mxu0 0
            %1328 = vmatprep.subr.bf16.mxu0 0
            %1329 = vmatpush1.bf16.msra.mxu0 0
            %1330 = vmatprep.subr.bf16.mxu0 0
            %1331 = vmatpush1.bf16.msra.mxu0 0
            %1332 = vmatprep.mubr.bf16.mxu0 0
            %1333 = vmatmul.mubr.bf16.gmra.mrb[0].mxu0 %v1228
            %v1334 = vpop.f32.mrb[0].mxu0
            %v1335 = vadd.f32 %v1250, %v1334
            %v1336 = vpop.f32.mrb[0].mxu0
            %v1337 = vpop.f32.mrb[0].mxu0
            %v1338 = vpop.f32.mrb[0].mxu0
            %1339 = vdwg.mxu0
            %1340 = vst [vmem:[#allocation6] sm:$0x3] %v1335
          $region92: #{simple_gcn_forward.1} parent=83 // pred_fallthru
            _
        $region84: #{simple_gcn_forward.1} parent=71 // pred_fallthru
          _
        // Predicated region
        $region93: #{simple_gcn_forward.1} parent=71 // pred_check
          %p1341 = pneg %p338
        $region94: #{simple_gcn_forward.1} parent=71 // pred_check_branch
          %1343 = sbr.rel (%p1341) target = $region96
        $region95: #{simple_gcn_forward.1} parent=71 // pred_region
          %s1345 = ssub.s32 32, 32
          %1346 = vsyncadd [#allocation7], %s1345
          %s1348 = sshll.u32 [#allocation6], 4
          %s1349 = int_to_ptr.vmem [resolvable:$true] %s1348
          %1351 = dma.vmem_to_hbm [thread:$0]  %s1349, 32, %s13, [#allocation7]
        $region96: #{simple_gcn_forward.1} parent=71 // pred_fallthru
          _
        // Predicated region
        $region97: #{simple_gcn_forward.1} parent=71 // pred_check
          %p1352 = pneg %p338
        $region98: #{simple_gcn_forward.1} parent=71 // pred_check_branch
          %1354 = sbr.rel (%p1352) target = $region100
        $region99: #{simple_gcn_forward.1} parent=71 // pred_region
          %1355 = dma.done [#allocation7], 32
        $region100: #{simple_gcn_forward.1} parent=71 // pred_fallthru
          _
      $region72: #{simple_gcn_forward.1} parent=5 // pred_fallthru
        _
      %p1356 = scmp.le.s32.totalorder 2, %s20
      // Predicated region
      $region101: #{simple_gcn_forward.1} parent=5 // pred_check
        %p1357 = pneg %p1356
      $region102: #{simple_gcn_forward.1} parent=5 // pred_check_branch
        %1359 = sbr.rel (%p1357) target = $region104
      $region103: #{simple_gcn_forward.1} parent=5 // pred_region
        %s1360 = ssub.s32 %s20, 2
      $region104: #{simple_gcn_forward.1} parent=5 // pred_fallthru
        _
    $region6: #{simple_gcn_forward.1} parent=1 // loop_footer
      %s24 = sadd.s32 1, %s20
    $region7: #{simple_gcn_forward.1} parent=1 // loop_footer_branch
      %19 = sbr.rel target = $region3
    $region8: #{simple_gcn_forward.1} parent=1 // loop_exit
      _
    %1361 = vsyncpa [#allocation7], 1
    %s1362 = scalar_lea.sflag [#allocation7], 1
    %1363 = vsyncpa %s1362, 1

</llo_original>
